<compile_context>
chip_gen: v7x
topology: tpu7x:2x2x1
jax: 0.10.0
libtpu: 0.0.40
codegen_flags: <defaults>
</compile_context>

<pallas_src>
import functools

import jax
import jax.numpy as jnp
from jax import lax
from jax.experimental import pallas as pl
from jax.experimental.pallas import tpu as pltpu


# ----------------------------------------------------------------------------
# Pallas kernel: per-mode complex channel contraction (real-block MXU matmul)
#   [Re|Im][m, b, :] = [xr|xi][m, b, :] @ [[wr, wi], [-wi, wr]][m]
# ----------------------------------------------------------------------------
def _spectral_contract_kernel(xs_ref, ws_ref, os_ref, *, chunk):
    """Mode-major, real/imag fused on the channel (lane) axis.

    xs_ref: (bm, B,   2*Cin)   activations, [xr | xi] on last axis
    ws_ref: (bm, Cin, 2*Cout)  weights,     [wr | wi] on last axis
    os_ref: (bm, B,   2*Cout)  outputs f32, [Re | Im] on last axis
    """
    bm = xs_ref.shape[0]
    cin = xs_ref.shape[-1] // 2
    cout = ws_ref.shape[-1] // 2
    n_chunks = bm // chunk

    def body(c, carry):
        m0 = pl.multiple_of(c * chunk, chunk)
        x = xs_ref[pl.ds(m0, chunk)]            # (chunk, B, 2Cin)
        w_top = ws_ref[pl.ds(m0, chunk)]        # (chunk, Cin, 2Cout) = [wr | wi]
        xr = x[:, :, :cin]
        xi = x[:, :, cin:]
        wr = w_top[:, :, :cout]
        wi = w_top[:, :, cout:]
        # bottom row of the 2x2 real block, assembled in VMEM (no extra HBM bytes)
        w_bot = jnp.concatenate([-wi, wr], axis=-1)          # (chunk, Cin, 2Cout)
        # [xr|xi] @ [[wr,wi],[-wi,wr]] = [xr@wr - xi@wi | xr@wi + xi@wr]
        acc = jnp.einsum("mbi,mio->mbo", xr, w_top,
                         preferred_element_type=jnp.float32)
        acc = acc + jnp.einsum("mbi,mio->mbo", xi, w_bot,
                               preferred_element_type=jnp.float32)
        os_ref[pl.ds(m0, chunk)] = acc.astype(os_ref.dtype)
        return carry

    lax.fori_loop(0, n_chunks, body, 0, unroll=False)


# ----------------------------------------------------------------------------
# VMEM / block-size selection (tile-padding aware, generation aware)
# ----------------------------------------------------------------------------
def _round_up(v, m):
    return ((v + m - 1) // m) * m


def _padded_block_bytes(second_minor, minor, dtype_bytes):
    """Bytes of one per-mode slice after (sublane, 128-lane) tile padding."""
    sublanes = 8 * (4 // dtype_bytes)       # 8 (f32), 16 (bf16), 32 (int8/fp8)
    return _round_up(second_minor, sublanes) * _round_up(minor, 128) * dtype_bytes


def _vmem_limit_bytes():
    """Generation-aware scoped-VMEM limit (leave headroom for Mosaic scratch)."""
    try:
        kind = jax.devices()[0].device_kind.lower()
    except Exception:  # pragma: no cover - defensive
        kind = ""
    if "v7" in kind:
        return 32 * 1024 * 1024          # 64 MiB physical on v7x: stay tight
    if "v5" in kind or "v6" in kind:
        return 64 * 1024 * 1024          # 128 MiB physical on v5e / v6e
    return 32 * 1024 * 1024              # unknown chip: conservative


def _choose_block_m(M, B, Cin, Cout, x_bytes, w_bytes, o_bytes, budget):
    """Largest mode-block whose *padded*, double-buffered footprint (plus ~2
    weight-slab-sized in-kernel temporaries) fits the budget, keeps >= 4 grid
    steps (2 TensorCores on v7x, each with prefetch overlap), and divides M."""
    xs_pm = _padded_block_bytes(B, 2 * Cin, x_bytes)
    ws_pm = _padded_block_bytes(Cin, 2 * Cout, w_bytes)
    os_pm = _padded_block_bytes(B, 2 * Cout, o_bytes)
    per_mode = 2 * (xs_pm + ws_pm + os_pm) + 2 * ws_pm
    cap = max(1, budget // per_mode)
    cap = min(cap, 256, max(1, M // 4))
    for bm in range(min(cap, M), 0, -1):
        if M % bm == 0:
            return bm
    return 1


def spectral_contract(xs, ws, *, block_m=None, mode_chunk=16):
    """xs: (M, B, 2*Cin), ws: (M, Cin, 2*Cout) -> (M, B, 2*Cout) float32."""
    M, B, two_cin = xs.shape
    cin = two_cin // 2
    cout = ws.shape[-1] // 2

    vmem_limit = _vmem_limit_bytes()
    if block_m is None:
        block_m = _choose_block_m(
            M, B, cin, cout,
            x_bytes=jnp.dtype(xs.dtype).itemsize,
            w_bytes=jnp.dtype(ws.dtype).itemsize,
            o_bytes=4,
            budget=(vmem_limit * 3) // 4)
    assert M % block_m == 0, "block_m must divide the mode count"

    # bounded per-step unroll: process the block in sub-chunks of <= mode_chunk
    chunk = min(mode_chunk, block_m)
    while block_m % chunk:
        chunk -= 1

    grid = (M // block_m,)
    kernel = functools.partial(_spectral_contract_kernel, chunk=chunk)

    return pl.pallas_call(
        kernel,
        grid=grid,
        in_specs=[
            pl.BlockSpec((block_m, B, two_cin), lambda m: (m, 0, 0)),
            pl.BlockSpec((block_m, cin, 2 * cout), lambda m: (m, 0, 0)),
        ],
        out_specs=pl.BlockSpec((block_m, B, 2 * cout), lambda m: (m, 0, 0)),
        out_shape=jax.ShapeDtypeStruct((M, B, 2 * cout), jnp.float32),
        compiler_params=pltpu.CompilerParams(
            dimension_semantics=("parallel",),
            vmem_limit_bytes=vmem_limit),
    )(xs, ws)


# ----------------------------------------------------------------------------
# Weight packing: done ONCE per sub-conv (weights and `indices` are static),
# outside the jitted forward -> no per-call weight transpose. bf16 weights
# halve the dominant (zero-reuse) HBM weight stream; MXU accumulates in f32.
# On v6e an int8 + per-mode-scale variant (fp8 on v7x) would halve this again.
# ----------------------------------------------------------------------------
def pack_spectral_weights(weight_r, weight_i, indices, compute_dtype=jnp.bfloat16):
    """weight_{r,i}: (2*n_layers, Cin, Cout, m1, m2) -> (M, Cin, 2*Cout) [wr|wi]."""
    w0r, w0i = weight_r[2 * indices], weight_i[2 * indices]
    w1r, w1i = weight_r[2 * indices + 1], weight_i[2 * indices + 1]
    wr = jnp.concatenate([w0r, w1r], axis=2)              # (Cin, Cout, 2*m1, m2)
    wi = jnp.concatenate([w0i, w1i], axis=2)
    Cin, Cout, m1x2, m2 = wr.shape
    M = m1x2 * m2
    wr = jnp.transpose(wr.reshape(Cin, Cout, M), (2, 0, 1))   # (M, Cin, Cout)
    wi = jnp.transpose(wi.reshape(Cin, Cout, M), (2, 0, 1))
    return jnp.concatenate([wr, wi], axis=-1).astype(compute_dtype)


# ----------------------------------------------------------------------------
# SubConv2d forward = joint FactorizedSpectralConv.forward(x, indices)
# ----------------------------------------------------------------------------
@functools.partial(jax.jit, static_argnames=("indices", "n_modes"))
def sub_conv2d_forward(x, ws, bias, *, indices, n_modes):
    """x: (B, Cin, H, W) float32.  ws: packed weights (M, Cin, 2*Cout).
    bias: (n_layers, Cout, 1, 1)."""
    B, Cin, H, W = x.shape
    m1, m2 = n_modes
    Cout = ws.shape[-1] // 2
    M = 2 * m1 * m2

    # TODO(synk): rfft2 / irfft2 have no Pallas TPU equivalent; done in plain JAX.
    x_ft = jnp.fft.rfft2(x.astype(jnp.float32), axes=(-2, -1))  # (B,Cin,H,W//2+1)

    # kept modes: H corners [0:m1] and [H-m1:H], rfft dim [0:m2].  Slice +
    # real/imag split + mode-major transpose fuse into one XLA copy.
    x_kept = jnp.concatenate(
        [x_ft[:, :, :m1, :m2], x_ft[:, :, H - m1:, :m2]], axis=2)   # (B,Cin,2*m1,m2)
    xr = jnp.real(x_kept).reshape(B, Cin, M)
    xi = jnp.imag(x_kept).reshape(B, Cin, M)
    xs = jnp.transpose(jnp.concatenate([xr, xi], axis=1), (2, 0, 1))  # (M,B,2Cin)
    xs = xs.astype(ws.dtype)

    os = spectral_contract(xs, ws)                                  # (M,B,2Cout) f32

    out_kept = os[..., :Cout] + 1j * os[..., Cout:]                 # (M,B,Cout)
    out_kept = jnp.transpose(out_kept, (1, 2, 0)).reshape(B, Cout, 2 * m1, m2)

    Wf = W // 2 + 1
    out_fft = jnp.zeros((B, Cout, H, Wf), dtype=jnp.complex64)
    out_fft = out_fft.at[:, :, :m1, :m2].set(out_kept[:, :, :m1])
    out_fft = out_fft.at[:, :, H - m1:, :m2].set(out_kept[:, :, m1:])

    y = jnp.fft.irfft2(out_fft, s=(H, W), axes=(-2, -1))
    y = y + bias[indices][None]          # bias[indices]: (Cout,1,1) broadcast
    return y.astype(x.dtype)


# pure-JAX reference for self-checking the Pallas contraction path
def _reference_forward(x, weight_r, weight_i, bias, *, indices, n_modes):
    B, Cin, H, W = x.shape
    m1, m2 = n_modes
    x_ft = jnp.fft.rfft2(x.astype(jnp.float32), axes=(-2, -1))
    w = weight_r + 1j * weight_i
    Cout = w.shape[2]
    out_fft = jnp.zeros((B, Cout, H, W // 2 + 1), dtype=jnp.complex64)
    out_fft = out_fft.at[:, :, :m1, :m2].set(
        jnp.einsum("bixy,ioxy->boxy", x_ft[:, :, :m1, :m2], w[2 * indices]))
    out_fft = out_fft.at[:, :, H - m1:, :m2].set(
        jnp.einsum("bixy,ioxy->boxy", x_ft[:, :, H - m1:, :m2], w[2 * indices + 1]))
    y = jnp.fft.irfft2(out_fft, s=(H, W), axes=(-2, -1))
    return (y + bias[indices][None]).astype(x.dtype)


if __name__ == "__main__":
    # small, deterministic config consistent with the module
    B, Cin, Cout, H, W = 2, 4, 4, 16, 16
    n_modes = (4, 4)          # kept (half-)modes per corner
    n_layers = 3              # mother joint conv holds weights for 3 sub-convs
    indices = 1               # this SubConv2d picks layer index 1

    key = jax.random.PRNGKey(0)
    kx, kwr, kwi, kb = jax.random.split(key, 4)

    x = jax.random.normal(kx, (B, Cin, H, W), dtype=jnp.float32)
    scale = 1.0 / (Cin * Cout)
    weight_r = scale * jax.random.normal(
        kwr, (2 * n_layers, Cin, Cout, n_modes[0], n_modes[1]), dtype=jnp.float32)
    weight_i = scale * jax.random.normal(
        kwi, (2 * n_layers, Cin, Cout, n_modes[0], n_modes[1]), dtype=jnp.float32)
    bias = jax.random.normal(kb, (n_layers, Cout, 1, 1), dtype=jnp.float32)

    # pack weights to mode-major [wr|wi] bf16 layout once (static per sub-conv)
    ws = pack_spectral_weights(weight_r, weight_i, indices,
                               compute_dtype=jnp.bfloat16)

    y = sub_conv2d_forward(x, ws, bias, indices=indices, n_modes=n_modes)
    y = jax.block_until_ready(y)

    y_ref = _reference_forward(x, weight_r, weight_i, bias,
                               indices=indices, n_modes=n_modes)
    assert y.shape == (B, Cout, H, W)
    # bf16 operands with f32 accumulation: tolerance loosened vs f32 reference.
    err = float(jnp.max(jnp.abs(y - y_ref)))
    assert jnp.allclose(y, y_ref, atol=2e-2, rtol=2e-2), f"max abs err {err}"

    print("KERNEL_OK")
</pallas_src>

<mosaic_0001>
module attributes {stable_mosaic.version = 11 : i64} {
  func.func @_spectral_contract_kernel(%arg0: i32, %arg1: memref<8x2x8xbf16, #tpu.memory_space<vmem>>, %arg2: memref<8x4x8xbf16, #tpu.memory_space<vmem>>, %arg3: memref<8x2x8xf32, #tpu.memory_space<vmem>>) attributes {dimension_semantics = [#tpu.dimension_semantics<parallel>], iteration_bounds = array<i64: 4>, scalar_prefetch = 0 : i64, scratch_operands = 0 : i64, tpu.core_type = #tpu.core_type<tc>, window_params = [{transform_indices = @transform_0, window_bounds = array<i64: 8, 2, 8>}, {transform_indices = @transform_1, window_bounds = array<i64: 8, 4, 8>}, {transform_indices = @transform_2, window_bounds = array<i64: 8, 2, 8>}]} {
    %c0_i32 = arith.constant 0 : i32
    %c8_i32 = arith.constant 8 : i32
    %0 = arith.muli %c0_i32, %c8_i32 : i32
    %1 = tpu.assume_multiple %0, 8 : i32
    %2 = arith.index_cast %1 : i32 to index
    %c0 = arith.constant 0 : index
    %c0_0 = arith.constant 0 : index
    %3 = vector.load %arg1[%2, %c0, %c0_0] : memref<8x2x8xbf16, #tpu.memory_space<vmem>>, vector<8x2x8xbf16>
    %4 = arith.index_cast %1 : i32 to index
    %c0_1 = arith.constant 0 : index
    %c0_2 = arith.constant 0 : index
    %5 = vector.load %arg2[%4, %c0_1, %c0_2] : memref<8x4x8xbf16, #tpu.memory_space<vmem>>, vector<8x4x8xbf16>
    %6 = vector.extract_strided_slice %3 {offsets = [0, 0, 0], sizes = [8, 2, 4], strides = [1, 1, 1]} : vector<8x2x8xbf16> to vector<8x2x4xbf16>
    %7 = vector.extract_strided_slice %3 {offsets = [0, 0, 4], sizes = [8, 2, 4], strides = [1, 1, 1]} : vector<8x2x8xbf16> to vector<8x2x4xbf16>
    %8 = vector.extract_strided_slice %5 {offsets = [0, 0, 0], sizes = [8, 4, 4], strides = [1, 1, 1]} : vector<8x4x8xbf16> to vector<8x4x4xbf16>
    %9 = vector.extract_strided_slice %5 {offsets = [0, 0, 4], sizes = [8, 4, 4], strides = [1, 1, 1]} : vector<8x4x8xbf16> to vector<8x4x4xbf16>
    %cst = arith.constant 0.000000e+00 : bf16
    %10 = vector.broadcast %cst : bf16 to vector<8x4x4xbf16>
    %11 = arith.subf %10, %9 : vector<8x4x4xbf16>
    %12 = tpu.concatenate %11, %8 in 2 : vector<8x4x4xbf16>, vector<8x4x4xbf16> -> vector<8x4x8xbf16>
    "tpu.trace_start"() <{level = 10 : i32, message = "mbi,mio->mbo"}> : () -> ()
    %cst_3 = arith.constant dense<0.000000e+00> : vector<8x2x8xf32>
    %13 = tpu.matmul %6, %5, %cst_3 {dimension_numbers = #tpu.dot_dimension_numbers<[2], [1], [1], [2], [0, 0, 0, 1, 1, 2], [0], [0]>} : vector<8x2x4xbf16>, vector<8x4x8xbf16>, vector<8x2x8xf32> -> vector<8x2x8xf32>
    %cst_4 = arith.constant dense<0.000000e+00> : vector<8x2x8xf32>
    %14 = tpu.matmul %7, %12, %cst_4 {dimension_numbers = #tpu.dot_dimension_numbers<[2], [1], [1], [2], [0, 0, 0, 1, 1, 2], [0], [0]>} : vector<8x2x4xbf16>, vector<8x4x8xbf16>, vector<8x2x8xf32> -> vector<8x2x8xf32>
    "tpu.trace_stop"() : () -> ()
    %15 = arith.addf %13, %14 : vector<8x2x8xf32>
    %16 = arith.index_cast %1 : i32 to index
    %c0_5 = arith.constant 0 : index
    %c0_6 = arith.constant 0 : index
    %17 = vector.load %arg3[%16, %c0_5, %c0_6] : memref<8x2x8xf32, #tpu.memory_space<vmem>>, vector<8x2x8xf32>
    tpu.vector_store %arg3[%16, %c0_5, %c0_6], %15 {strides = array<i32>} : memref<8x2x8xf32, #tpu.memory_space<vmem>>, vector<8x2x8xf32>,
    %c1_i32 = arith.constant 1 : i32
    return
  }
  func.func @transform_0(%arg0: i32) -> (i32, i32, i32) {
    %c0_i32 = arith.constant 0 : i32
    %c0_i32_0 = arith.constant 0 : i32
    %c0_i32_1 = arith.constant 0 : i32
    return %arg0, %c0_i32, %c0_i32_0 : i32, i32, i32
  }
  func.func @transform_1(%arg0: i32) -> (i32, i32, i32) {
    %c0_i32 = arith.constant 0 : i32
    %c0_i32_0 = arith.constant 0 : i32
    %c0_i32_1 = arith.constant 0 : i32
    return %arg0, %c0_i32, %c0_i32_0 : i32, i32, i32
  }
  func.func @transform_2(%arg0: i32) -> (i32, i32, i32) {
    %c0_i32 = arith.constant 0 : i32
    %c0_i32_0 = arith.constant 0 : i32
    %c0_i32_1 = arith.constant 0 : i32
    return %arg0, %c0_i32, %c0_i32_0 : i32, i32, i32
  }
}

</mosaic_0001>

<llo_original>
// kernel: reverse.0
$region0: #{reverse.0}
  %s0 = inlined_call_operand.vmem [shape: f32[2,4,16,7], index: 0, kind: input, shape index: {}]
  %s1 = inlined_call_operand.vmem [shape: f32[2,4,16,7], index: 1, kind: output, shape index: {}]
  $region1: #{reverse.0} parent=0
    #allocation0 [shape = 'u8[65536]{0}', space=vmem, size = 0x10000, scoped, tag = 'operand span for operand 0']
    #allocation1 [shape = 'u8[32768]{0}', space=vmem, size = 0x8000, scoped, tag = 'operand span for operand 1']
    %s2 = scalar_lea.vmem [#allocation0], 8
    // Predicated region
    $region2: #{reverse.0} parent=1 // pred_check
      _
    $region3: #{reverse.0} parent=1 // pred_check_branch
      %4 = sbr.rel (0) target = $region5
    $region4: #{reverse.0} parent=1 // pred_region
      // Predicated region
      $region6: #{reverse.0} parent=4 // pred_check
        _
      $region7: #{reverse.0} parent=4 // pred_check_branch
        %6 = sbr.rel (0) target = $region9
      $region8: #{reverse.0} parent=4 // pred_region
        // Predicated region
        $region21: #{reverse.0} parent=8 // pred_check
          _
        $region22: #{reverse.0} parent=8 // pred_check_branch
          %35 = sbr.rel (0) target = $region24
        $region23: #{reverse.0} parent=8 // pred_region
          loop: start=0, step=1, limit=1
          $region25: #{reverse.0} parent=23 // loop_pre_header
            _
          $region26: #{reverse.0} parent=23 // loop_header
            %s37 = sphi 0, %s41
            %p38 = scmp.ge.s32.totalorder %s37, 1
            %s42 = sphi %s0, %s0
            %s43 = sphi %s2, %s2
          $region27: #{reverse.0} parent=23 // loop_header_branch
            %40 = sbr.rel (%p38) target = $region31
          $region28: #{reverse.0} parent=23 // loop_body
            %v44 = vld [vmem:[%s42] sm:$0xff]
            %45 = vst [vmem:[%s43] sm:$0xff] %v44
            %v46 = vld [vmem:[%s42 + $0x8] sm:$0xff]
            %47 = vst [vmem:[%s43 + $0x10] sm:$0xff] %v46
            %v48 = vld [vmem:[%s42 + $0x10] sm:$0xff]
            %49 = vst [vmem:[%s43 + $0x20] sm:$0xff] %v48
            %v50 = vld [vmem:[%s42 + $0x18] sm:$0xff]
            %51 = vst [vmem:[%s43 + $0x30] sm:$0xff] %v50
            %v52 = vld [vmem:[%s42 + $0x20] sm:$0xff]
            %53 = vst [vmem:[%s43 + $0x40] sm:$0xff] %v52
            %v54 = vld [vmem:[%s42 + $0x28] sm:$0xff]
            %55 = vst [vmem:[%s43 + $0x50] sm:$0xff] %v54
            %v56 = vld [vmem:[%s42 + $0x30] sm:$0xff]
            %57 = vst [vmem:[%s43 + $0x60] sm:$0xff] %v56
            %v58 = vld [vmem:[%s42 + $0x38] sm:$0xff]
            %59 = vst [vmem:[%s43 + $0x70] sm:$0xff] %v58
          $region29: #{reverse.0} parent=23 // loop_footer
            %s41 = sadd.s32 1, %s37
          $region30: #{reverse.0} parent=23 // loop_footer_branch
            %36 = sbr.rel target = $region26
          $region31: #{reverse.0} parent=23 // loop_exit
            _
        $region24: #{reverse.0} parent=8 // pred_fallthru
          _
        // Predicated region
        $region32: #{reverse.0} parent=8 // pred_check
          _
        $region33: #{reverse.0} parent=8 // pred_check_branch
          %61 = sbr.rel target = $region35
        $region34: #{reverse.0} parent=8 // pred_region
          _
        $region35: #{reverse.0} parent=8 // pred_fallthru
          _
      $region9: #{reverse.0} parent=4 // pred_fallthru
        _
      // Predicated region
      $region10: #{reverse.0} parent=4 // pred_check
        _
      $region11: #{reverse.0} parent=4 // pred_check_branch
        %8 = sbr.rel target = $region13
      $region12: #{reverse.0} parent=4 // pred_region
        loop: start=0, step=1, limit=1
        $region14: #{reverse.0} parent=12 // loop_pre_header
          _
        $region15: #{reverse.0} parent=12 // loop_header
          %s11 = sphi 0, %s15
          %p12 = scmp.ge.s32.totalorder %s11, 1
          %s16 = sphi %s0, %s0
          %s17 = sphi %s2, %s2
        $region16: #{reverse.0} parent=12 // loop_header_branch
          %14 = sbr.rel (%p12) target = $region20
        $region17: #{reverse.0} parent=12 // loop_body
          %v18 = vld [vmem:[%s16] sm:$0xff]
          %19 = vst [vmem:[%s17] sm:$0xff] %v18
          %v20 = vld [vmem:[%s16 + $0x8] sm:$0xff]
          %21 = vst [vmem:[%s17 + $0x10] sm:$0xff] %v20
          %v22 = vld [vmem:[%s16 + $0x10] sm:$0xff]
          %23 = vst [vmem:[%s17 + $0x20] sm:$0xff] %v22
          %v24 = vld [vmem:[%s16 + $0x18] sm:$0xff]
          %25 = vst [vmem:[%s17 + $0x30] sm:$0xff] %v24
          %v26 = vld [vmem:[%s16 + $0x20] sm:$0xff]
          %27 = vst [vmem:[%s17 + $0x40] sm:$0xff] %v26
          %v28 = vld [vmem:[%s16 + $0x28] sm:$0xff]
          %29 = vst [vmem:[%s17 + $0x50] sm:$0xff] %v28
          %v30 = vld [vmem:[%s16 + $0x30] sm:$0xff]
          %31 = vst [vmem:[%s17 + $0x60] sm:$0xff] %v30
          %v32 = vld [vmem:[%s16 + $0x38] sm:$0xff]
          %33 = vst [vmem:[%s17 + $0x70] sm:$0xff] %v32
        $region18: #{reverse.0} parent=12 // loop_footer
          %s15 = sadd.s32 1, %s11
        $region19: #{reverse.0} parent=12 // loop_footer_branch
          %10 = sbr.rel target = $region15
        $region20: #{reverse.0} parent=12 // loop_exit
          _
      $region13: #{reverse.0} parent=4 // pred_fallthru
        _
    $region5: #{reverse.0} parent=1 // pred_fallthru
      _
    %62 = vnop
    %s63 = scalar_lea.vmem [#allocation0], 7
    %v64 = vld [vmem:[%s63] ss:$-1 sm:$0xff]
    %v65 = vrot.slane %v64, 1
    %66 = vst [vmem:[#allocation1] sm:$0xff] %v65
    %s67 = scalar_lea.vmem [#allocation0], 8
    %s68 = scalar_lea.vmem %s67, 7 [#allocation0]
    %v69 = vld [vmem:[%s68] ss:$-1 sm:$0xff]
    %v70 = vrot.slane %v69, 1
    %v71 = vlaneseq
    %v72 = vshrl.u32 %v71, 7
    %vm73 = vcmp.lt.s32.totalorder %v72, 7
    %74 = vst.msk [vmem:[#allocation1] sm:$0xff] %vm73, %v70
    %s75 = scalar_lea.vmem [#allocation1], 8
    %s76 = scalar_lea.vmem [#allocation0], 16
    %s77 = scalar_lea.vmem %s76, 7 [#allocation0]
    %v78 = vld [vmem:[%s77] ss:$-1 sm:$0xff]
    %v79 = vrot.slane %v78, 1
    %80 = vst [vmem:[%s75] sm:$0xff] %v79
    %s81 = scalar_lea.vmem %s76, 8 [#allocation0]
    %s82 = scalar_lea.vmem %s81, 7 [#allocation0]
    %v83 = vld [vmem:[%s82] ss:$-1 sm:$0xff]
    %v84 = vrot.slane %v83, 1
    %v85 = vlaneseq
    %v86 = vshrl.u32 %v85, 7
    %vm87 = vcmp.lt.s32.totalorder %v86, 7
    %88 = vst.msk [vmem:[%s75] sm:$0xff] %vm87, %v84
    %s89 = scalar_lea.vmem [#allocation1], 16
    %s90 = scalar_lea.vmem [#allocation0], 32
    %s91 = scalar_lea.vmem %s90, 7 [#allocation0]
    %v92 = vld [vmem:[%s91] ss:$-1 sm:$0xff]
    %v93 = vrot.slane %v92, 1
    %94 = vst [vmem:[%s89] sm:$0xff] %v93
    %s95 = scalar_lea.vmem %s90, 8 [#allocation0]
    %s96 = scalar_lea.vmem %s95, 7 [#allocation0]
    %v97 = vld [vmem:[%s96] ss:$-1 sm:$0xff]
    %v98 = vrot.slane %v97, 1
    %v99 = vlaneseq
    %v100 = vshrl.u32 %v99, 7
    %vm101 = vcmp.lt.s32.totalorder %v100, 7
    %102 = vst.msk [vmem:[%s89] sm:$0xff] %vm101, %v98
    %s103 = scalar_lea.vmem [#allocation1], 24
    %s104 = scalar_lea.vmem [#allocation0], 48
    %s105 = scalar_lea.vmem %s104, 7 [#allocation0]
    %v106 = vld [vmem:[%s105] ss:$-1 sm:$0xff]
    %v107 = vrot.slane %v106, 1
    %108 = vst [vmem:[%s103] sm:$0xff] %v107
    %s109 = scalar_lea.vmem %s104, 8 [#allocation0]
    %s110 = scalar_lea.vmem %s109, 7 [#allocation0]
    %v111 = vld [vmem:[%s110] ss:$-1 sm:$0xff]
    %v112 = vrot.slane %v111, 1
    %v113 = vlaneseq
    %v114 = vshrl.u32 %v113, 7
    %vm115 = vcmp.lt.s32.totalorder %v114, 7
    %116 = vst.msk [vmem:[%s103] sm:$0xff] %vm115, %v112
    %s117 = scalar_lea.vmem [#allocation1], 32
    %s118 = scalar_lea.vmem [#allocation0], 64
    %s119 = scalar_lea.vmem %s118, 7 [#allocation0]
    %v120 = vld [vmem:[%s119] ss:$-1 sm:$0xff]
    %v121 = vrot.slane %v120, 1
    %122 = vst [vmem:[%s117] sm:$0xff] %v121
    %s123 = scalar_lea.vmem %s118, 8 [#allocation0]
    %s124 = scalar_lea.vmem %s123, 7 [#allocation0]
    %v125 = vld [vmem:[%s124] ss:$-1 sm:$0xff]
    %v126 = vrot.slane %v125, 1
    %v127 = vlaneseq
    %v128 = vshrl.u32 %v127, 7
    %vm129 = vcmp.lt.s32.totalorder %v128, 7
    %130 = vst.msk [vmem:[%s117] sm:$0xff] %vm129, %v126
    %s131 = scalar_lea.vmem [#allocation1], 40
    %s132 = scalar_lea.vmem [#allocation0], 80
    %s133 = scalar_lea.vmem %s132, 7 [#allocation0]
    %v134 = vld [vmem:[%s133] ss:$-1 sm:$0xff]
    %v135 = vrot.slane %v134, 1
    %136 = vst [vmem:[%s131] sm:$0xff] %v135
    %s137 = scalar_lea.vmem %s132, 8 [#allocation0]
    %s138 = scalar_lea.vmem %s137, 7 [#allocation0]
    %v139 = vld [vmem:[%s138] ss:$-1 sm:$0xff]
    %v140 = vrot.slane %v139, 1
    %v141 = vlaneseq
    %v142 = vshrl.u32 %v141, 7
    %vm143 = vcmp.lt.s32.totalorder %v142, 7
    %144 = vst.msk [vmem:[%s131] sm:$0xff] %vm143, %v140
    %s145 = scalar_lea.vmem [#allocation1], 48
    %s146 = scalar_lea.vmem [#allocation0], 96
    %s147 = scalar_lea.vmem %s146, 7 [#allocation0]
    %v148 = vld [vmem:[%s147] ss:$-1 sm:$0xff]
    %v149 = vrot.slane %v148, 1
    %150 = vst [vmem:[%s145] sm:$0xff] %v149
    %s151 = scalar_lea.vmem %s146, 8 [#allocation0]
    %s152 = scalar_lea.vmem %s151, 7 [#allocation0]
    %v153 = vld [vmem:[%s152] ss:$-1 sm:$0xff]
    %v154 = vrot.slane %v153, 1
    %v155 = vlaneseq
    %v156 = vshrl.u32 %v155, 7
    %vm157 = vcmp.lt.s32.totalorder %v156, 7
    %158 = vst.msk [vmem:[%s145] sm:$0xff] %vm157, %v154
    %s159 = scalar_lea.vmem [#allocation1], 56
    %s160 = scalar_lea.vmem [#allocation0], 112
    %s161 = scalar_lea.vmem %s160, 7 [#allocation0]
    %v162 = vld [vmem:[%s161] ss:$-1 sm:$0xff]
    %v163 = vrot.slane %v162, 1
    %164 = vst [vmem:[%s159] sm:$0xff] %v163
    %s165 = scalar_lea.vmem %s160, 8 [#allocation0]
    %s166 = scalar_lea.vmem %s165, 7 [#allocation0]
    %v167 = vld [vmem:[%s166] ss:$-1 sm:$0xff]
    %v168 = vrot.slane %v167, 1
    %v169 = vlaneseq
    %v170 = vshrl.u32 %v169, 7
    %vm171 = vcmp.lt.s32.totalorder %v170, 7
    %172 = vst.msk [vmem:[%s159] sm:$0xff] %vm171, %v168
    // Predicated region
    $region36: #{reverse.0} parent=1 // pred_check
      _
    $region37: #{reverse.0} parent=1 // pred_check_branch
      %174 = sbr.rel (0) target = $region39
    $region38: #{reverse.0} parent=1 // pred_region
      // Predicated region
      $region40: #{reverse.0} parent=38 // pred_check
        _
      $region41: #{reverse.0} parent=38 // pred_check_branch
        %176 = sbr.rel (0) target = $region43
      $region42: #{reverse.0} parent=38 // pred_region
        // Predicated region
        $region55: #{reverse.0} parent=42 // pred_check
          _
        $region56: #{reverse.0} parent=42 // pred_check_branch
          %205 = sbr.rel (0) target = $region58
        $region57: #{reverse.0} parent=42 // pred_region
          loop: start=0, step=1, limit=1
          $region59: #{reverse.0} parent=57 // loop_pre_header
            _
          $region60: #{reverse.0} parent=57 // loop_header
            %s207 = sphi 0, %s211
            %p208 = scmp.ge.s32.totalorder %s207, 1
            %s212 = sphi [#allocation1], [#allocation1]
            %s213 = sphi %s1, %s1
          $region61: #{reverse.0} parent=57 // loop_header_branch
            %210 = sbr.rel (%p208) target = $region65
          $region62: #{reverse.0} parent=57 // loop_body
            %v214 = vld [vmem:[%s212] sm:$0xff]
            %215 = vst [vmem:[%s213] sm:$0xff] %v214
            %v216 = vld [vmem:[%s212 + $0x8] sm:$0xff]
            %217 = vst [vmem:[%s213 + $0x8] sm:$0xff] %v216
            %v218 = vld [vmem:[%s212 + $0x10] sm:$0xff]
            %219 = vst [vmem:[%s213 + $0x10] sm:$0xff] %v218
            %v220 = vld [vmem:[%s212 + $0x18] sm:$0xff]
            %221 = vst [vmem:[%s213 + $0x18] sm:$0xff] %v220
            %v222 = vld [vmem:[%s212 + $0x20] sm:$0xff]
            %223 = vst [vmem:[%s213 + $0x20] sm:$0xff] %v222
            %v224 = vld [vmem:[%s212 + $0x28] sm:$0xff]
            %225 = vst [vmem:[%s213 + $0x28] sm:$0xff] %v224
            %v226 = vld [vmem:[%s212 + $0x30] sm:$0xff]
            %227 = vst [vmem:[%s213 + $0x30] sm:$0xff] %v226
            %v228 = vld [vmem:[%s212 + $0x38] sm:$0xff]
            %229 = vst [vmem:[%s213 + $0x38] sm:$0xff] %v228
          $region63: #{reverse.0} parent=57 // loop_footer
            %s211 = sadd.s32 1, %s207
          $region64: #{reverse.0} parent=57 // loop_footer_branch
            %206 = sbr.rel target = $region60
          $region65: #{reverse.0} parent=57 // loop_exit
            _
        $region58: #{reverse.0} parent=42 // pred_fallthru
          _
        // Predicated region
        $region66: #{reverse.0} parent=42 // pred_check
          _
        $region67: #{reverse.0} parent=42 // pred_check_branch
          %231 = sbr.rel target = $region69
        $region68: #{reverse.0} parent=42 // pred_region
          _
        $region69: #{reverse.0} parent=42 // pred_fallthru
          _
      $region43: #{reverse.0} parent=38 // pred_fallthru
        _
      // Predicated region
      $region44: #{reverse.0} parent=38 // pred_check
        _
      $region45: #{reverse.0} parent=38 // pred_check_branch
        %178 = sbr.rel target = $region47
      $region46: #{reverse.0} parent=38 // pred_region
        loop: start=0, step=1, limit=1
        $region48: #{reverse.0} parent=46 // loop_pre_header
          _
        $region49: #{reverse.0} parent=46 // loop_header
          %s181 = sphi 0, %s185
          %p182 = scmp.ge.s32.totalorder %s181, 1
          %s186 = sphi [#allocation1], [#allocation1]
          %s187 = sphi %s1, %s1
        $region50: #{reverse.0} parent=46 // loop_header_branch
          %184 = sbr.rel (%p182) target = $region54
        $region51: #{reverse.0} parent=46 // loop_body
          %v188 = vld [vmem:[%s186] sm:$0xff]
          %189 = vst [vmem:[%s187] sm:$0xff] %v188
          %v190 = vld [vmem:[%s186 + $0x8] sm:$0xff]
          %191 = vst [vmem:[%s187 + $0x8] sm:$0xff] %v190
          %v192 = vld [vmem:[%s186 + $0x10] sm:$0xff]
          %193 = vst [vmem:[%s187 + $0x10] sm:$0xff] %v192
          %v194 = vld [vmem:[%s186 + $0x18] sm:$0xff]
          %195 = vst [vmem:[%s187 + $0x18] sm:$0xff] %v194
          %v196 = vld [vmem:[%s186 + $0x20] sm:$0xff]
          %197 = vst [vmem:[%s187 + $0x20] sm:$0xff] %v196
          %v198 = vld [vmem:[%s186 + $0x28] sm:$0xff]
          %199 = vst [vmem:[%s187 + $0x28] sm:$0xff] %v198
          %v200 = vld [vmem:[%s186 + $0x30] sm:$0xff]
          %201 = vst [vmem:[%s187 + $0x30] sm:$0xff] %v200
          %v202 = vld [vmem:[%s186 + $0x38] sm:$0xff]
          %203 = vst [vmem:[%s187 + $0x38] sm:$0xff] %v202
        $region52: #{reverse.0} parent=46 // loop_footer
          %s185 = sadd.s32 1, %s181
        $region53: #{reverse.0} parent=46 // loop_footer_branch
          %180 = sbr.rel target = $region49
        $region54: #{reverse.0} parent=46 // loop_exit
          _
      $region47: #{reverse.0} parent=38 // pred_fallthru
        _
    $region39: #{reverse.0} parent=1 // pred_fallthru
      _
    %232 = vnop

// kernel: sub_conv2d_forward.1
$region0: #{sub_conv2d_forward.1}
  #allocation0 [shape = 'u32[]', space=smem, size = 0x4, offset = 0x4, fixed_abs, tag = 'smem constant byte address 0x4 - core index']
  #allocation1 [shape = 'u32[144,128]{1,0:T(1,128)}', space=vmem, size = 0x12000, scoped, tag = 'internal scratch']
  %s0 = inlined_call_operand.vmem [shape: bf16[32,2,8], index: 0, kind: input, shape index: {}]
  %s1 = inlined_call_operand.vmem [shape: bf16[32,4,8], index: 1, kind: input, shape index: {}]
  %s2 = inlined_call_operand.vmem [shape: f32[32,2,8], index: 2, kind: output, shape index: {}]
  %s3 = sld [smem:[#allocation0]]
  $region41: #{sub_conv2d_forward.1} parent=0
    _
  %s5 = ssub.s32 1, %s3
  %s6 = scalar_select 0, %s5, %s3
  loop: start=0, step=1, limit=6
  $region2: #{sub_conv2d_forward.1} parent=0 // loop_pre_header
    _
  $region3: #{sub_conv2d_forward.1} parent=0 // loop_header
    %s8 = sphi 0, %s12
    %p9 = scmp.ge.s32.totalorder %s8, 6
    %s18 = sphi 0, %s20
    %s21 = sphi 0, %s18
    %s22 = sphi 0, %s21
    %s38 = sphi 0, %s22
    %s44 = sphi 0, %s46
    %s47 = sphi 0, %s44
    %s48 = sphi 0, %s47
    %s64 = sphi 0, %s48
    %s70 = sphi 0, %s72
    %s73 = sphi 0, %s70
    %s74 = sphi 0, %s73
    %s90 = sphi 0, %s74
  $region4: #{sub_conv2d_forward.1} parent=0 // loop_header_branch
    %11 = sbr.rel (%p9) target = $region8
  $region5: #{sub_conv2d_forward.1} parent=0 // loop_body
    %s13 = ssub.s32 %s8, 1
    %s14 = ssub.s32 %s8, 2
    %s15 = sadd.s32 %s8, 1
    %s16 = ssub.s32 %s8, %s15
    %p17 = scmp.eq.s32.totalorder %s16, 0
    %s19 = sadd.s32 %s18, 1
    %s20 = scalar_select %p17, %s18, %s19
    %p23 = pneg %p17
    %p24 = scmp.eq.s32.totalorder %s8, 3
    %p25 = por %p23, %p24
    %p26 = scmp.ne.s32.totalorder %s18, %s21
    %p27 = scmp.eq.s32.totalorder %s8, 0
    %p28 = por %p26, %p27
    %p29 = scmp.ne.s32.totalorder %s18, %s21
    %p30 = scmp.eq.s32.totalorder %s13, 3
    %p31 = por %p29, %p30
    %p32 = scmp.ne.s32.totalorder %s21, %s22
    %p33 = scmp.eq.s32.totalorder %s13, 0
    %p34 = por %p32, %p33
    %p35 = scmp.ne.s32.totalorder %s21, %s22
    %p36 = scmp.eq.s32.totalorder %s14, 3
    %p37 = por %p35, %p36
    %p39 = scmp.ne.s32.totalorder %s22, %s38
    %p40 = scmp.eq.s32.totalorder %s14, 0
    %p41 = por %p39, %p40
    %s42 = ssub.s32 %s8, %s15
    %p43 = scmp.eq.s32.totalorder %s42, 0
    %s45 = sadd.s32 %s44, 1
    %s46 = scalar_select %p43, %s44, %s45
    %p49 = pneg %p43
    %p50 = scmp.eq.s32.totalorder %s8, 3
    %p51 = por %p49, %p50
    %p52 = scmp.ne.s32.totalorder %s44, %s47
    %p53 = scmp.eq.s32.totalorder %s8, 0
    %p54 = por %p52, %p53
    %p55 = scmp.ne.s32.totalorder %s44, %s47
    %p56 = scmp.eq.s32.totalorder %s13, 3
    %p57 = por %p55, %p56
    %p58 = scmp.ne.s32.totalorder %s47, %s48
    %p59 = scmp.eq.s32.totalorder %s13, 0
    %p60 = por %p58, %p59
    %p61 = scmp.ne.s32.totalorder %s47, %s48
    %p62 = scmp.eq.s32.totalorder %s14, 3
    %p63 = por %p61, %p62
    %p65 = scmp.ne.s32.totalorder %s48, %s64
    %p66 = scmp.eq.s32.totalorder %s14, 0
    %p67 = por %p65, %p66
    %s68 = ssub.s32 %s8, %s15
    %p69 = scmp.eq.s32.totalorder %s68, 0
    %s71 = sadd.s32 %s70, 1
    %s72 = scalar_select %p69, %s70, %s71
    %p75 = pneg %p69
    %p76 = scmp.eq.s32.totalorder %s8, 3
    %p77 = por %p75, %p76
    %p78 = scmp.ne.s32.totalorder %s70, %s73
    %p79 = scmp.eq.s32.totalorder %s8, 0
    %p80 = por %p78, %p79
    %p81 = scmp.ne.s32.totalorder %s70, %s73
    %p82 = scmp.eq.s32.totalorder %s13, 3
    %p83 = por %p81, %p82
    %p84 = scmp.ne.s32.totalorder %s73, %s74
    %p85 = scmp.eq.s32.totalorder %s13, 0
    %p86 = por %p84, %p85
    %p87 = scmp.ne.s32.totalorder %s73, %s74
    %p88 = scmp.eq.s32.totalorder %s14, 3
    %p89 = por %p87, %p88
    %p91 = scmp.ne.s32.totalorder %s74, %s90
    %p92 = scmp.eq.s32.totalorder %s14, 0
    %p93 = por %p91, %p92
    %p94 = scmp.le.s32.totalorder 1, %s8
    %p95 = scmp.lt.s32.totalorder %s8, 5
    %p96 = pnand %p94, %p95
    %p97 = pneg %p96
    // Predicated region
    $region9: #{sub_conv2d_forward.1} parent=5 // pred_check
      _
    $region10: #{sub_conv2d_forward.1} parent=5 // pred_check_branch
      %99 = sbr.rel (%p96) target = $region12
    $region11: #{sub_conv2d_forward.1} parent=5 // pred_region
      %s100 = ssub.s32 %s8, 1
    $region12: #{sub_conv2d_forward.1} parent=5 // pred_fallthru
      _
    %p101 = scmp.lt.s32.totalorder %s8, 4
    // Predicated region
    $region13: #{sub_conv2d_forward.1} parent=5 // pred_check
      %p102 = pneg %p101
    $region14: #{sub_conv2d_forward.1} parent=5 // pred_check_branch
      %104 = sbr.rel (%p102) target = $region16
    $region15: #{sub_conv2d_forward.1} parent=5 // pred_region
      // Predicated region
      $region17: #{sub_conv2d_forward.1} parent=15 // pred_check
        %p105 = pneg %p28
      $region18: #{sub_conv2d_forward.1} parent=15 // pred_check_branch
        %107 = sbr.rel (%p105) target = $region20
      $region19: #{sub_conv2d_forward.1} parent=15 // pred_region
        %s108 = smul.u32 8, %s8
        %p109 = scmp.lt.s32.totalorder %s108, 31
        %s110 = scalar_select %p109, %s108, 31
        %s111 = scalar_lea.vmem %s0, %s110
        %s112 = smul.u32 8, %s8
      $region20: #{sub_conv2d_forward.1} parent=15 // pred_fallthru
        _
      // Predicated region
      $region21: #{sub_conv2d_forward.1} parent=15 // pred_check
        %p113 = pneg %p54
      $region22: #{sub_conv2d_forward.1} parent=15 // pred_check_branch
        %115 = sbr.rel (%p113) target = $region24
      $region23: #{sub_conv2d_forward.1} parent=15 // pred_region
        %s116 = smul.u32 8, %s8
        %p117 = scmp.lt.s32.totalorder %s116, 31
        %s118 = scalar_select %p117, %s116, 31
        %s119 = smul.addr %s118, 2
        %s120 = scalar_lea.vmem %s1, %s119
        %s121 = smul.u32 8, %s8
      $region24: #{sub_conv2d_forward.1} parent=15 // pred_fallthru
        _
    $region16: #{sub_conv2d_forward.1} parent=5 // pred_fallthru
      _
    %p122 = scmp.le.s32.totalorder 1, %s8
    %p123 = scmp.lt.s32.totalorder %s8, 5
    %p124 = pnand %p122, %p123
    %p125 = pneg %p124
    // Predicated region
    $region25: #{sub_conv2d_forward.1} parent=5 // pred_check
      _
    $region26: #{sub_conv2d_forward.1} parent=5 // pred_check_branch
      %127 = sbr.rel (%p124) target = $region28
    $region27: #{sub_conv2d_forward.1} parent=5 // pred_region
      %s128 = ssub.s32 %s8, 1
      %s129 = smul.u32 8, %s13
      %p130 = scmp.lt.s32.totalorder %s129, 31
      %s131 = scalar_select %p130, %s129, 31
      %s132 = scalar_lea.vmem %s0, %s131
      %p133 = pneg %p34
      %p134 = pneg %p31
      %s135 = smul.u32 8, %s13
      %p136 = scmp.lt.s32.totalorder %s135, 31
      %s137 = scalar_select %p136, %s135, 31
      %s138 = smul.addr %s137, 2
      %s139 = scalar_lea.vmem %s1, %s138
      %p140 = pneg %p60
      %p141 = pneg %p57
      %p142 = pneg %p86
      %p143 = pneg %p83
      %s144 = smul.u32 8, %s13
      %p145 = scmp.lt.s32.totalorder %s144, 31
      %s146 = scalar_select %p145, %s144, 31
      %s147 = smul.addr %s146, 2
      %s148 = scalar_lea.vmem %s2, %s147
      %s149 = smul.u32 8, %s13
      %p150 = scmp.lt.s32.totalorder %s149, 31
      %s151 = scalar_select %p150, %s149, 31
      %s152 = scalar_lea.vmem %s0, %s151
      %s153 = smul.u32 8, %s13
      %s154 = smul.u32 8, %s13
      %p155 = scmp.lt.s32.totalorder %s154, 31
      %s156 = scalar_select %p155, %s154, 31
      %s157 = smul.addr %s156, 2
      %s158 = scalar_lea.vmem %s1, %s157
      %s159 = smul.u32 8, %s13
      %s160 = smul.u32 8, %s13
      %p161 = scmp.lt.s32.totalorder %s160, 31
      %s162 = scalar_select %p161, %s160, 31
      %s163 = smul.addr %s162, 2
      %s164 = scalar_lea.vmem %s2, %s163
      %s165 = smul.u32 8, %s13
      %v167 = vld [vmem:[%s152] sm:$0x1]
      %v168 = vld [vmem:[%s152 + $0x1] sm:$0x1]
      %v169 = vld [vmem:[%s152 + $0x2] sm:$0x1]
      %v170 = vld [vmem:[%s152 + $0x3] sm:$0x1]
      %v171 = vld [vmem:[%s152 + $0x4] sm:$0x1]
      %v172 = vld [vmem:[%s152 + $0x5] sm:$0x1]
      %v173 = vld [vmem:[%s152 + $0x6] sm:$0x1]
      %v174 = vld [vmem:[%s152 + $0x7] sm:$0x1]
      %v175 = vld [vmem:[%s158] sm:$0x3]
      %v176 = vld [vmem:[%s158 + $0x2] sm:$0x3]
      %v177 = vld [vmem:[%s158 + $0x4] sm:$0x3]
      %v178 = vld [vmem:[%s158 + $0x6] sm:$0x3]
      %v179 = vld [vmem:[%s158 + $0x8] sm:$0x3]
      %v180 = vld [vmem:[%s158 + $0xa] sm:$0x3]
      %v181 = vld [vmem:[%s158 + $0xc] sm:$0x3]
      %v182 = vld [vmem:[%s158 + $0xe] sm:$0x3]
      %v183 = vsub.bf16 0, %v175
      %v184 = vsub.bf16 0, %v176
      %v185 = vsub.bf16 0, %v177
      %v186 = vsub.bf16 0, %v178
      %v187 = vsub.bf16 0, %v179
      %v188 = vsub.bf16 0, %v180
      %v189 = vsub.bf16 0, %v181
      %v190 = vsub.bf16 0, %v182
      %v200 = vunpack.c.l.s4 1983009808
      %v201 = vunpack.c.0.s8 %v200
      %v202 = vlaneseq
      %v203 = vshrl.u32 %v202, 7
      %v204 = vsub.s32 %v201, %v203
      %v205 = vrot.slane %v183, %v204
      %v207 = vunpack.c.l.s4 1983009808
      %v208 = vunpack.c.0.s8 %v207
      %v209 = vlaneseq
      %v210 = vshrl.u32 %v209, 7
      %v211 = vsub.s32 %v208, %v210
      %v212 = vrot.slane %v184, %v211
      %v214 = vunpack.c.l.s4 1983009808
      %v215 = vunpack.c.0.s8 %v214
      %v216 = vlaneseq
      %v217 = vshrl.u32 %v216, 7
      %v218 = vsub.s32 %v215, %v217
      %v219 = vrot.slane %v185, %v218
      %v221 = vunpack.c.l.s4 1983009808
      %v222 = vunpack.c.0.s8 %v221
      %v223 = vlaneseq
      %v224 = vshrl.u32 %v223, 7
      %v225 = vsub.s32 %v222, %v224
      %v226 = vrot.slane %v186, %v225
      %v228 = vunpack.c.l.s4 1983009808
      %v229 = vunpack.c.0.s8 %v228
      %v230 = vlaneseq
      %v231 = vshrl.u32 %v230, 7
      %v232 = vsub.s32 %v229, %v231
      %v233 = vrot.slane %v187, %v232
      %v235 = vunpack.c.l.s4 1983009808
      %v236 = vunpack.c.0.s8 %v235
      %v237 = vlaneseq
      %v238 = vshrl.u32 %v237, 7
      %v239 = vsub.s32 %v236, %v238
      %v240 = vrot.slane %v188, %v239
      %v242 = vunpack.c.l.s4 1983009808
      %v243 = vunpack.c.0.s8 %v242
      %v244 = vlaneseq
      %v245 = vshrl.u32 %v244, 7
      %v246 = vsub.s32 %v243, %v245
      %v247 = vrot.slane %v189, %v246
      %v249 = vunpack.c.l.s4 1983009808
      %v250 = vunpack.c.0.s8 %v249
      %v251 = vlaneseq
      %v252 = vshrl.u32 %v251, 7
      %v253 = vsub.s32 %v250, %v252
      %v254 = vrot.slane %v190, %v253
      %255 = vrot.lane.b32.xlu0 %v205, 124
      %v256 = vpop.permute.xlu0 %255
      %257 = vrot.lane.b32.xlu0 %v212, 124
      %v258 = vpop.permute.xlu0 %257
      %259 = vrot.lane.b32.xlu0 %v219, 124
      %v260 = vpop.permute.xlu0 %259
      %261 = vrot.lane.b32.xlu0 %v226, 124
      %v262 = vpop.permute.xlu0 %261
      %263 = vrot.lane.b32.xlu0 %v233, 124
      %v264 = vpop.permute.xlu0 %263
      %265 = vrot.lane.b32.xlu0 %v240, 124
      %v266 = vpop.permute.xlu0 %265
      %267 = vrot.lane.b32.xlu0 %v247, 124
      %v268 = vpop.permute.xlu0 %267
      %269 = vrot.lane.b32.xlu0 %v254, 124
      %v270 = vpop.permute.xlu0 %269
      %v280 = vunpack.c.l.s4 1983009808
      %v281 = vunpack.c.0.s8 %v280
      %v282 = vlaneseq
      %v283 = vshrl.u32 %v282, 7
      %v284 = vsub.s32 %v281, %v283
      %v285 = vrot.slane %v175, %v284
      %v287 = vunpack.c.l.s4 1983009808
      %v288 = vunpack.c.0.s8 %v287
      %v289 = vlaneseq
      %v290 = vshrl.u32 %v289, 7
      %v291 = vsub.s32 %v288, %v290
      %v292 = vrot.slane %v176, %v291
      %v294 = vunpack.c.l.s4 1983009808
      %v295 = vunpack.c.0.s8 %v294
      %v296 = vlaneseq
      %v297 = vshrl.u32 %v296, 7
      %v298 = vsub.s32 %v295, %v297
      %v299 = vrot.slane %v177, %v298
      %v301 = vunpack.c.l.s4 1983009808
      %v302 = vunpack.c.0.s8 %v301
      %v303 = vlaneseq
      %v304 = vshrl.u32 %v303, 7
      %v305 = vsub.s32 %v302, %v304
      %v306 = vrot.slane %v178, %v305
      %v308 = vunpack.c.l.s4 1983009808
      %v309 = vunpack.c.0.s8 %v308
      %v310 = vlaneseq
      %v311 = vshrl.u32 %v310, 7
      %v312 = vsub.s32 %v309, %v311
      %v313 = vrot.slane %v179, %v312
      %v315 = vunpack.c.l.s4 1983009808
      %v316 = vunpack.c.0.s8 %v315
      %v317 = vlaneseq
      %v318 = vshrl.u32 %v317, 7
      %v319 = vsub.s32 %v316, %v318
      %v320 = vrot.slane %v180, %v319
      %v322 = vunpack.c.l.s4 1983009808
      %v323 = vunpack.c.0.s8 %v322
      %v324 = vlaneseq
      %v325 = vshrl.u32 %v324, 7
      %v326 = vsub.s32 %v323, %v325
      %v327 = vrot.slane %v181, %v326
      %v329 = vunpack.c.l.s4 1983009808
      %v330 = vunpack.c.0.s8 %v329
      %v331 = vlaneseq
      %v332 = vshrl.u32 %v331, 7
      %v333 = vsub.s32 %v330, %v332
      %v334 = vrot.slane %v182, %v333
      %335 = vrot.lane.b32.xlu0 %v285, 4
      %v336 = vpop.permute.xlu0 %335
      %337 = vrot.lane.b32.xlu0 %v292, 4
      %v338 = vpop.permute.xlu0 %337
      %339 = vrot.lane.b32.xlu0 %v299, 4
      %v340 = vpop.permute.xlu0 %339
      %341 = vrot.lane.b32.xlu0 %v306, 4
      %v342 = vpop.permute.xlu0 %341
      %343 = vrot.lane.b32.xlu0 %v313, 4
      %v344 = vpop.permute.xlu0 %343
      %345 = vrot.lane.b32.xlu0 %v320, 4
      %v346 = vpop.permute.xlu0 %345
      %347 = vrot.lane.b32.xlu0 %v327, 4
      %v348 = vpop.permute.xlu0 %347
      %349 = vrot.lane.b32.xlu0 %v334, 4
      %v350 = vpop.permute.xlu0 %349
      %vm351 = vcmask 31744
      %v354 = vsel %vm351, %v256, %v336
      %v357 = vsel %vm351, %v258, %v338
      %v360 = vsel %vm351, %v260, %v340
      %v363 = vsel %vm351, %v262, %v342
      %v366 = vsel %vm351, %v264, %v344
      %v369 = vsel %vm351, %v266, %v346
      %v372 = vsel %vm351, %v268, %v348
      %v375 = vsel %vm351, %v270, %v350
      %v378 = vunpack.c.l.s4 1966171168
      %v379 = vunpack.c.0.s8 %v378
      %v380 = vlaneseq
      %v381 = vshrl.u32 %v380, 7
      %v382 = vsub.s32 %v379, %v381
      %v383 = vrot.slane %v167, %v382
      %v385 = vunpack.c.l.s4 1966171168
      %v386 = vunpack.c.0.s8 %v385
      %v387 = vlaneseq
      %v388 = vshrl.u32 %v387, 7
      %v389 = vsub.s32 %v386, %v388
      %v390 = vrot.slane %v383, %v389
      %391 = vrot.lane.b32.xlu0 %v390, 124
      %v392 = vpop.permute.xlu0 %391
      %v394 = vsel %vm351, %v392, 0
      %vm396 = vcmask 1041408
      %v397 = vsel %vm396, %v354, 0
      %399 = vmatprep.subr.bf16.mxu0 0
      %400 = vmatpush1.bf16.msra.mxu0 %v397
      %401 = vmatprep.subr.bf16.mxu0 0
      %402 = vmatpush1.bf16.msra.mxu0 0
      %403 = vmatprep.subr.bf16.mxu0 0
      %404 = vmatpush1.bf16.msra.mxu0 0
      %405 = vmatprep.subr.bf16.mxu0 0
      %406 = vmatpush1.bf16.msra.mxu0 0
      %407 = vmatprep.subr.bf16.mxu0 0
      %408 = vmatpush1.bf16.msra.mxu0 0
      %409 = vmatprep.subr.bf16.mxu0 0
      %410 = vmatpush1.bf16.msra.mxu0 0
      %411 = vmatprep.subr.bf16.mxu0 0
      %412 = vmatpush1.bf16.msra.mxu0 0
      %413 = vmatprep.subr.bf16.mxu0 0
      %414 = vmatpush1.bf16.msra.mxu0 0
      %415 = vmatprep.subr.bf16.mxu0 0
      %416 = vmatpush1.bf16.msra.mxu0 0
      %417 = vmatprep.subr.bf16.mxu0 0
      %418 = vmatpush1.bf16.msra.mxu0 0
      %419 = vmatprep.subr.bf16.mxu0 0
      %420 = vmatpush1.bf16.msra.mxu0 0
      %421 = vmatprep.subr.bf16.mxu0 0
      %422 = vmatpush1.bf16.msra.mxu0 0
      %423 = vmatprep.subr.bf16.mxu0 0
      %424 = vmatpush1.bf16.msra.mxu0 0
      %425 = vmatprep.subr.bf16.mxu0 0
      %426 = vmatpush1.bf16.msra.mxu0 0
      %427 = vmatprep.subr.bf16.mxu0 0
      %428 = vmatpush1.bf16.msra.mxu0 0
      %429 = vmatprep.subr.bf16.mxu0 0
      %430 = vmatpush1.bf16.msra.mxu0 0
      %431 = vmatprep.mubr.bf16.mxu0 0
      %432 = vmatmul.mubr.bf16.gmra.mrb[0].mxu0 %v394
      %v433 = vpop.f32.mrb[0].mxu0
      %v434 = vadd.f32 0.0, %v433
      %v435 = vpop.f32.mrb[0].mxu0
      %v436 = vpop.f32.mrb[0].mxu0
      %v437 = vpop.f32.mrb[0].mxu0
      %438 = vdwg.mxu0
      %v441 = vunpack.c.l.s4 1966171168
      %v442 = vunpack.c.0.s8 %v441
      %v443 = vlaneseq
      %v444 = vshrl.u32 %v443, 7
      %v445 = vsub.s32 %v442, %v444
      %v446 = vrot.slane %v168, %v445
      %v448 = vunpack.c.l.s4 1966171168
      %v449 = vunpack.c.0.s8 %v448
      %v450 = vlaneseq
      %v451 = vshrl.u32 %v450, 7
      %v452 = vsub.s32 %v449, %v451
      %v453 = vrot.slane %v446, %v452
      %454 = vrot.lane.b32.xlu0 %v453, 124
      %v455 = vpop.permute.xlu0 %454
      %v457 = vsel %vm351, %v455, 0
      %v459 = vsel %vm396, %v357, 0
      %461 = vmatprep.subr.bf16.mxu0 0
      %462 = vmatpush1.bf16.msra.mxu0 %v459
      %463 = vmatprep.subr.bf16.mxu0 0
      %464 = vmatpush1.bf16.msra.mxu0 0
      %465 = vmatprep.subr.bf16.mxu0 0
      %466 = vmatpush1.bf16.msra.mxu0 0
      %467 = vmatprep.subr.bf16.mxu0 0
      %468 = vmatpush1.bf16.msra.mxu0 0
      %469 = vmatprep.subr.bf16.mxu0 0
      %470 = vmatpush1.bf16.msra.mxu0 0
      %471 = vmatprep.subr.bf16.mxu0 0
      %472 = vmatpush1.bf16.msra.mxu0 0
      %473 = vmatprep.subr.bf16.mxu0 0
      %474 = vmatpush1.bf16.msra.mxu0 0
      %475 = vmatprep.subr.bf16.mxu0 0
      %476 = vmatpush1.bf16.msra.mxu0 0
      %477 = vmatprep.subr.bf16.mxu0 0
      %478 = vmatpush1.bf16.msra.mxu0 0
      %479 = vmatprep.subr.bf16.mxu0 0
      %480 = vmatpush1.bf16.msra.mxu0 0
      %481 = vmatprep.subr.bf16.mxu0 0
      %482 = vmatpush1.bf16.msra.mxu0 0
      %483 = vmatprep.subr.bf16.mxu0 0
      %484 = vmatpush1.bf16.msra.mxu0 0
      %485 = vmatprep.subr.bf16.mxu0 0
      %486 = vmatpush1.bf16.msra.mxu0 0
      %487 = vmatprep.subr.bf16.mxu0 0
      %488 = vmatpush1.bf16.msra.mxu0 0
      %489 = vmatprep.subr.bf16.mxu0 0
      %490 = vmatpush1.bf16.msra.mxu0 0
      %491 = vmatprep.subr.bf16.mxu0 0
      %492 = vmatpush1.bf16.msra.mxu0 0
      %493 = vmatprep.mubr.bf16.mxu0 0
      %494 = vmatmul.mubr.bf16.gmra.mrb[0].mxu0 %v457
      %v495 = vpop.f32.mrb[0].mxu0
      %v496 = vadd.f32 0.0, %v495
      %v497 = vpop.f32.mrb[0].mxu0
      %v498 = vpop.f32.mrb[0].mxu0
      %v499 = vpop.f32.mrb[0].mxu0
      %500 = vdwg.mxu0
      %v503 = vunpack.c.l.s4 1966171168
      %v504 = vunpack.c.0.s8 %v503
      %v505 = vlaneseq
      %v506 = vshrl.u32 %v505, 7
      %v507 = vsub.s32 %v504, %v506
      %v508 = vrot.slane %v169, %v507
      %v510 = vunpack.c.l.s4 1966171168
      %v511 = vunpack.c.0.s8 %v510
      %v512 = vlaneseq
      %v513 = vshrl.u32 %v512, 7
      %v514 = vsub.s32 %v511, %v513
      %v515 = vrot.slane %v508, %v514
      %516 = vrot.lane.b32.xlu0 %v515, 124
      %v517 = vpop.permute.xlu0 %516
      %v519 = vsel %vm351, %v517, 0
      %v521 = vsel %vm396, %v360, 0
      %523 = vmatprep.subr.bf16.mxu0 0
      %524 = vmatpush1.bf16.msra.mxu0 %v521
      %525 = vmatprep.subr.bf16.mxu0 0
      %526 = vmatpush1.bf16.msra.mxu0 0
      %527 = vmatprep.subr.bf16.mxu0 0
      %528 = vmatpush1.bf16.msra.mxu0 0
      %529 = vmatprep.subr.bf16.mxu0 0
      %530 = vmatpush1.bf16.msra.mxu0 0
      %531 = vmatprep.subr.bf16.mxu0 0
      %532 = vmatpush1.bf16.msra.mxu0 0
      %533 = vmatprep.subr.bf16.mxu0 0
      %534 = vmatpush1.bf16.msra.mxu0 0
      %535 = vmatprep.subr.bf16.mxu0 0
      %536 = vmatpush1.bf16.msra.mxu0 0
      %537 = vmatprep.subr.bf16.mxu0 0
      %538 = vmatpush1.bf16.msra.mxu0 0
      %539 = vmatprep.subr.bf16.mxu0 0
      %540 = vmatpush1.bf16.msra.mxu0 0
      %541 = vmatprep.subr.bf16.mxu0 0
      %542 = vmatpush1.bf16.msra.mxu0 0
      %543 = vmatprep.subr.bf16.mxu0 0
      %544 = vmatpush1.bf16.msra.mxu0 0
      %545 = vmatprep.subr.bf16.mxu0 0
      %546 = vmatpush1.bf16.msra.mxu0 0
      %547 = vmatprep.subr.bf16.mxu0 0
      %548 = vmatpush1.bf16.msra.mxu0 0
      %549 = vmatprep.subr.bf16.mxu0 0
      %550 = vmatpush1.bf16.msra.mxu0 0
      %551 = vmatprep.subr.bf16.mxu0 0
      %552 = vmatpush1.bf16.msra.mxu0 0
      %553 = vmatprep.subr.bf16.mxu0 0
      %554 = vmatpush1.bf16.msra.mxu0 0
      %555 = vmatprep.mubr.bf16.mxu0 0
      %556 = vmatmul.mubr.bf16.gmra.mrb[0].mxu0 %v519
      %v557 = vpop.f32.mrb[0].mxu0
      %v558 = vadd.f32 0.0, %v557
      %v559 = vpop.f32.mrb[0].mxu0
      %v560 = vpop.f32.mrb[0].mxu0
      %v561 = vpop.f32.mrb[0].mxu0
      %562 = vdwg.mxu0
      %v565 = vunpack.c.l.s4 1966171168
      %v566 = vunpack.c.0.s8 %v565
      %v567 = vlaneseq
      %v568 = vshrl.u32 %v567, 7
      %v569 = vsub.s32 %v566, %v568
      %v570 = vrot.slane %v170, %v569
      %v572 = vunpack.c.l.s4 1966171168
      %v573 = vunpack.c.0.s8 %v572
      %v574 = vlaneseq
      %v575 = vshrl.u32 %v574, 7
      %v576 = vsub.s32 %v573, %v575
      %v577 = vrot.slane %v570, %v576
      %578 = vrot.lane.b32.xlu0 %v577, 124
      %v579 = vpop.permute.xlu0 %578
      %v581 = vsel %vm351, %v579, 0
      %v583 = vsel %vm396, %v363, 0
      %585 = vmatprep.subr.bf16.mxu0 0
      %586 = vmatpush1.bf16.msra.mxu0 %v583
      %587 = vmatprep.subr.bf16.mxu0 0
      %588 = vmatpush1.bf16.msra.mxu0 0
      %589 = vmatprep.subr.bf16.mxu0 0
      %590 = vmatpush1.bf16.msra.mxu0 0
      %591 = vmatprep.subr.bf16.mxu0 0
      %592 = vmatpush1.bf16.msra.mxu0 0
      %593 = vmatprep.subr.bf16.mxu0 0
      %594 = vmatpush1.bf16.msra.mxu0 0
      %595 = vmatprep.subr.bf16.mxu0 0
      %596 = vmatpush1.bf16.msra.mxu0 0
      %597 = vmatprep.subr.bf16.mxu0 0
      %598 = vmatpush1.bf16.msra.mxu0 0
      %599 = vmatprep.subr.bf16.mxu0 0
      %600 = vmatpush1.bf16.msra.mxu0 0
      %601 = vmatprep.subr.bf16.mxu0 0
      %602 = vmatpush1.bf16.msra.mxu0 0
      %603 = vmatprep.subr.bf16.mxu0 0
      %604 = vmatpush1.bf16.msra.mxu0 0
      %605 = vmatprep.subr.bf16.mxu0 0
      %606 = vmatpush1.bf16.msra.mxu0 0
      %607 = vmatprep.subr.bf16.mxu0 0
      %608 = vmatpush1.bf16.msra.mxu0 0
      %609 = vmatprep.subr.bf16.mxu0 0
      %610 = vmatpush1.bf16.msra.mxu0 0
      %611 = vmatprep.subr.bf16.mxu0 0
      %612 = vmatpush1.bf16.msra.mxu0 0
      %613 = vmatprep.subr.bf16.mxu0 0
      %614 = vmatpush1.bf16.msra.mxu0 0
      %615 = vmatprep.subr.bf16.mxu0 0
      %616 = vmatpush1.bf16.msra.mxu0 0
      %617 = vmatprep.mubr.bf16.mxu0 0
      %618 = vmatmul.mubr.bf16.gmra.mrb[0].mxu0 %v581
      %v619 = vpop.f32.mrb[0].mxu0
      %v620 = vadd.f32 0.0, %v619
      %v621 = vpop.f32.mrb[0].mxu0
      %v622 = vpop.f32.mrb[0].mxu0
      %v623 = vpop.f32.mrb[0].mxu0
      %624 = vdwg.mxu0
      %v627 = vunpack.c.l.s4 1966171168
      %v628 = vunpack.c.0.s8 %v627
      %v629 = vlaneseq
      %v630 = vshrl.u32 %v629, 7
      %v631 = vsub.s32 %v628, %v630
      %v632 = vrot.slane %v171, %v631
      %v634 = vunpack.c.l.s4 1966171168
      %v635 = vunpack.c.0.s8 %v634
      %v636 = vlaneseq
      %v637 = vshrl.u32 %v636, 7
      %v638 = vsub.s32 %v635, %v637
      %v639 = vrot.slane %v632, %v638
      %640 = vrot.lane.b32.xlu0 %v639, 124
      %v641 = vpop.permute.xlu0 %640
      %v643 = vsel %vm351, %v641, 0
      %v645 = vsel %vm396, %v366, 0
      %647 = vmatprep.subr.bf16.mxu0 0
      %648 = vmatpush1.bf16.msra.mxu0 %v645
      %649 = vmatprep.subr.bf16.mxu0 0
      %650 = vmatpush1.bf16.msra.mxu0 0
      %651 = vmatprep.subr.bf16.mxu0 0
      %652 = vmatpush1.bf16.msra.mxu0 0
      %653 = vmatprep.subr.bf16.mxu0 0
      %654 = vmatpush1.bf16.msra.mxu0 0
      %655 = vmatprep.subr.bf16.mxu0 0
      %656 = vmatpush1.bf16.msra.mxu0 0
      %657 = vmatprep.subr.bf16.mxu0 0
      %658 = vmatpush1.bf16.msra.mxu0 0
      %659 = vmatprep.subr.bf16.mxu0 0
      %660 = vmatpush1.bf16.msra.mxu0 0
      %661 = vmatprep.subr.bf16.mxu0 0
      %662 = vmatpush1.bf16.msra.mxu0 0
      %663 = vmatprep.subr.bf16.mxu0 0
      %664 = vmatpush1.bf16.msra.mxu0 0
      %665 = vmatprep.subr.bf16.mxu0 0
      %666 = vmatpush1.bf16.msra.mxu0 0
      %667 = vmatprep.subr.bf16.mxu0 0
      %668 = vmatpush1.bf16.msra.mxu0 0
      %669 = vmatprep.subr.bf16.mxu0 0
      %670 = vmatpush1.bf16.msra.mxu0 0
      %671 = vmatprep.subr.bf16.mxu0 0
      %672 = vmatpush1.bf16.msra.mxu0 0
      %673 = vmatprep.subr.bf16.mxu0 0
      %674 = vmatpush1.bf16.msra.mxu0 0
      %675 = vmatprep.subr.bf16.mxu0 0
      %676 = vmatpush1.bf16.msra.mxu0 0
      %677 = vmatprep.subr.bf16.mxu0 0
      %678 = vmatpush1.bf16.msra.mxu0 0
      %679 = vmatprep.mubr.bf16.mxu0 0
      %680 = vmatmul.mubr.bf16.gmra.mrb[0].mxu0 %v643
      %v681 = vpop.f32.mrb[0].mxu0
      %v682 = vadd.f32 0.0, %v681
      %v683 = vpop.f32.mrb[0].mxu0
      %v684 = vpop.f32.mrb[0].mxu0
      %v685 = vpop.f32.mrb[0].mxu0
      %686 = vdwg.mxu0
      %v689 = vunpack.c.l.s4 1966171168
      %v690 = vunpack.c.0.s8 %v689
      %v691 = vlaneseq
      %v692 = vshrl.u32 %v691, 7
      %v693 = vsub.s32 %v690, %v692
      %v694 = vrot.slane %v172, %v693
      %v696 = vunpack.c.l.s4 1966171168
      %v697 = vunpack.c.0.s8 %v696
      %v698 = vlaneseq
      %v699 = vshrl.u32 %v698, 7
      %v700 = vsub.s32 %v697, %v699
      %v701 = vrot.slane %v694, %v700
      %702 = vrot.lane.b32.xlu0 %v701, 124
      %v703 = vpop.permute.xlu0 %702
      %v705 = vsel %vm351, %v703, 0
      %v707 = vsel %vm396, %v369, 0
      %709 = vmatprep.subr.bf16.mxu0 0
      %710 = vmatpush1.bf16.msra.mxu0 %v707
      %711 = vmatprep.subr.bf16.mxu0 0
      %712 = vmatpush1.bf16.msra.mxu0 0
      %713 = vmatprep.subr.bf16.mxu0 0
      %714 = vmatpush1.bf16.msra.mxu0 0
      %715 = vmatprep.subr.bf16.mxu0 0
      %716 = vmatpush1.bf16.msra.mxu0 0
      %717 = vmatprep.subr.bf16.mxu0 0
      %718 = vmatpush1.bf16.msra.mxu0 0
      %719 = vmatprep.subr.bf16.mxu0 0
      %720 = vmatpush1.bf16.msra.mxu0 0
      %721 = vmatprep.subr.bf16.mxu0 0
      %722 = vmatpush1.bf16.msra.mxu0 0
      %723 = vmatprep.subr.bf16.mxu0 0
      %724 = vmatpush1.bf16.msra.mxu0 0
      %725 = vmatprep.subr.bf16.mxu0 0
      %726 = vmatpush1.bf16.msra.mxu0 0
      %727 = vmatprep.subr.bf16.mxu0 0
      %728 = vmatpush1.bf16.msra.mxu0 0
      %729 = vmatprep.subr.bf16.mxu0 0
      %730 = vmatpush1.bf16.msra.mxu0 0
      %731 = vmatprep.subr.bf16.mxu0 0
      %732 = vmatpush1.bf16.msra.mxu0 0
      %733 = vmatprep.subr.bf16.mxu0 0
      %734 = vmatpush1.bf16.msra.mxu0 0
      %735 = vmatprep.subr.bf16.mxu0 0
      %736 = vmatpush1.bf16.msra.mxu0 0
      %737 = vmatprep.subr.bf16.mxu0 0
      %738 = vmatpush1.bf16.msra.mxu0 0
      %739 = vmatprep.subr.bf16.mxu0 0
      %740 = vmatpush1.bf16.msra.mxu0 0
      %741 = vmatprep.mubr.bf16.mxu0 0
      %742 = vmatmul.mubr.bf16.gmra.mrb[0].mxu0 %v705
      %v743 = vpop.f32.mrb[0].mxu0
      %v744 = vadd.f32 0.0, %v743
      %v745 = vpop.f32.mrb[0].mxu0
      %v746 = vpop.f32.mrb[0].mxu0
      %v747 = vpop.f32.mrb[0].mxu0
      %748 = vdwg.mxu0
      %v751 = vunpack.c.l.s4 1966171168
      %v752 = vunpack.c.0.s8 %v751
      %v753 = vlaneseq
      %v754 = vshrl.u32 %v753, 7
      %v755 = vsub.s32 %v752, %v754
      %v756 = vrot.slane %v173, %v755
      %v758 = vunpack.c.l.s4 1966171168
      %v759 = vunpack.c.0.s8 %v758
      %v760 = vlaneseq
      %v761 = vshrl.u32 %v760, 7
      %v762 = vsub.s32 %v759, %v761
      %v763 = vrot.slane %v756, %v762
      %764 = vrot.lane.b32.xlu0 %v763, 124
      %v765 = vpop.permute.xlu0 %764
      %v767 = vsel %vm351, %v765, 0
      %v769 = vsel %vm396, %v372, 0
      %771 = vmatprep.subr.bf16.mxu0 0
      %772 = vmatpush1.bf16.msra.mxu0 %v769
      %773 = vmatprep.subr.bf16.mxu0 0
      %774 = vmatpush1.bf16.msra.mxu0 0
      %775 = vmatprep.subr.bf16.mxu0 0
      %776 = vmatpush1.bf16.msra.mxu0 0
      %777 = vmatprep.subr.bf16.mxu0 0
      %778 = vmatpush1.bf16.msra.mxu0 0
      %779 = vmatprep.subr.bf16.mxu0 0
      %780 = vmatpush1.bf16.msra.mxu0 0
      %781 = vmatprep.subr.bf16.mxu0 0
      %782 = vmatpush1.bf16.msra.mxu0 0
      %783 = vmatprep.subr.bf16.mxu0 0
      %784 = vmatpush1.bf16.msra.mxu0 0
      %785 = vmatprep.subr.bf16.mxu0 0
      %786 = vmatpush1.bf16.msra.mxu0 0
      %787 = vmatprep.subr.bf16.mxu0 0
      %788 = vmatpush1.bf16.msra.mxu0 0
      %789 = vmatprep.subr.bf16.mxu0 0
      %790 = vmatpush1.bf16.msra.mxu0 0
      %791 = vmatprep.subr.bf16.mxu0 0
      %792 = vmatpush1.bf16.msra.mxu0 0
      %793 = vmatprep.subr.bf16.mxu0 0
      %794 = vmatpush1.bf16.msra.mxu0 0
      %795 = vmatprep.subr.bf16.mxu0 0
      %796 = vmatpush1.bf16.msra.mxu0 0
      %797 = vmatprep.subr.bf16.mxu0 0
      %798 = vmatpush1.bf16.msra.mxu0 0
      %799 = vmatprep.subr.bf16.mxu0 0
      %800 = vmatpush1.bf16.msra.mxu0 0
      %801 = vmatprep.subr.bf16.mxu0 0
      %802 = vmatpush1.bf16.msra.mxu0 0
      %803 = vmatprep.mubr.bf16.mxu0 0
      %804 = vmatmul.mubr.bf16.gmra.mrb[0].mxu0 %v767
      %v805 = vpop.f32.mrb[0].mxu0
      %v806 = vadd.f32 0.0, %v805
      %v807 = vpop.f32.mrb[0].mxu0
      %v808 = vpop.f32.mrb[0].mxu0
      %v809 = vpop.f32.mrb[0].mxu0
      %810 = vdwg.mxu0
      %v813 = vunpack.c.l.s4 1966171168
      %v814 = vunpack.c.0.s8 %v813
      %v815 = vlaneseq
      %v816 = vshrl.u32 %v815, 7
      %v817 = vsub.s32 %v814, %v816
      %v818 = vrot.slane %v174, %v817
      %v820 = vunpack.c.l.s4 1966171168
      %v821 = vunpack.c.0.s8 %v820
      %v822 = vlaneseq
      %v823 = vshrl.u32 %v822, 7
      %v824 = vsub.s32 %v821, %v823
      %v825 = vrot.slane %v818, %v824
      %826 = vrot.lane.b32.xlu0 %v825, 124
      %v827 = vpop.permute.xlu0 %826
      %v829 = vsel %vm351, %v827, 0
      %v831 = vsel %vm396, %v375, 0
      %833 = vmatprep.subr.bf16.mxu0 0
      %834 = vmatpush1.bf16.msra.mxu0 %v831
      %835 = vmatprep.subr.bf16.mxu0 0
      %836 = vmatpush1.bf16.msra.mxu0 0
      %837 = vmatprep.subr.bf16.mxu0 0
      %838 = vmatpush1.bf16.msra.mxu0 0
      %839 = vmatprep.subr.bf16.mxu0 0
      %840 = vmatpush1.bf16.msra.mxu0 0
      %841 = vmatprep.subr.bf16.mxu0 0
      %842 = vmatpush1.bf16.msra.mxu0 0
      %843 = vmatprep.subr.bf16.mxu0 0
      %844 = vmatpush1.bf16.msra.mxu0 0
      %845 = vmatprep.subr.bf16.mxu0 0
      %846 = vmatpush1.bf16.msra.mxu0 0
      %847 = vmatprep.subr.bf16.mxu0 0
      %848 = vmatpush1.bf16.msra.mxu0 0
      %849 = vmatprep.subr.bf16.mxu0 0
      %850 = vmatpush1.bf16.msra.mxu0 0
      %851 = vmatprep.subr.bf16.mxu0 0
      %852 = vmatpush1.bf16.msra.mxu0 0
      %853 = vmatprep.subr.bf16.mxu0 0
      %854 = vmatpush1.bf16.msra.mxu0 0
      %855 = vmatprep.subr.bf16.mxu0 0
      %856 = vmatpush1.bf16.msra.mxu0 0
      %857 = vmatprep.subr.bf16.mxu0 0
      %858 = vmatpush1.bf16.msra.mxu0 0
      %859 = vmatprep.subr.bf16.mxu0 0
      %860 = vmatpush1.bf16.msra.mxu0 0
      %861 = vmatprep.subr.bf16.mxu0 0
      %862 = vmatpush1.bf16.msra.mxu0 0
      %863 = vmatprep.subr.bf16.mxu0 0
      %864 = vmatpush1.bf16.msra.mxu0 0
      %865 = vmatprep.mubr.bf16.mxu0 0
      %866 = vmatmul.mubr.bf16.gmra.mrb[0].mxu0 %v829
      %v867 = vpop.f32.mrb[0].mxu0
      %v868 = vadd.f32 0.0, %v867
      %v869 = vpop.f32.mrb[0].mxu0
      %v870 = vpop.f32.mrb[0].mxu0
      %v871 = vpop.f32.mrb[0].mxu0
      %872 = vdwg.mxu0
      %v874 = vsel %vm351, %v167, 0
      %v877 = vsel %vm396, %v175, 0
      %879 = vmatprep.subr.bf16.mxu0 0
      %880 = vmatpush1.bf16.msra.mxu0 %v877
      %881 = vmatprep.subr.bf16.mxu0 0
      %882 = vmatpush1.bf16.msra.mxu0 0
      %883 = vmatprep.subr.bf16.mxu0 0
      %884 = vmatpush1.bf16.msra.mxu0 0
      %885 = vmatprep.subr.bf16.mxu0 0
      %886 = vmatpush1.bf16.msra.mxu0 0
      %887 = vmatprep.subr.bf16.mxu0 0
      %888 = vmatpush1.bf16.msra.mxu0 0
      %889 = vmatprep.subr.bf16.mxu0 0
      %890 = vmatpush1.bf16.msra.mxu0 0
      %891 = vmatprep.subr.bf16.mxu0 0
      %892 = vmatpush1.bf16.msra.mxu0 0
      %893 = vmatprep.subr.bf16.mxu0 0
      %894 = vmatpush1.bf16.msra.mxu0 0
      %895 = vmatprep.subr.bf16.mxu0 0
      %896 = vmatpush1.bf16.msra.mxu0 0
      %897 = vmatprep.subr.bf16.mxu0 0
      %898 = vmatpush1.bf16.msra.mxu0 0
      %899 = vmatprep.subr.bf16.mxu0 0
      %900 = vmatpush1.bf16.msra.mxu0 0
      %901 = vmatprep.subr.bf16.mxu0 0
      %902 = vmatpush1.bf16.msra.mxu0 0
      %903 = vmatprep.subr.bf16.mxu0 0
      %904 = vmatpush1.bf16.msra.mxu0 0
      %905 = vmatprep.subr.bf16.mxu0 0
      %906 = vmatpush1.bf16.msra.mxu0 0
      %907 = vmatprep.subr.bf16.mxu0 0
      %908 = vmatpush1.bf16.msra.mxu0 0
      %909 = vmatprep.subr.bf16.mxu0 0
      %910 = vmatpush1.bf16.msra.mxu0 0
      %911 = vmatprep.mubr.bf16.mxu0 0
      %912 = vmatmul.mubr.bf16.gmra.mrb[0].mxu0 %v874
      %v913 = vpop.f32.mrb[0].mxu0
      %v914 = vadd.f32 %v434, %v913
      %v915 = vpop.f32.mrb[0].mxu0
      %v916 = vpop.f32.mrb[0].mxu0
      %v917 = vpop.f32.mrb[0].mxu0
      %918 = vdwg.mxu0
      %v920 = vsel %vm351, %v168, 0
      %v923 = vsel %vm396, %v176, 0
      %925 = vmatprep.subr.bf16.mxu0 0
      %926 = vmatpush1.bf16.msra.mxu0 %v923
      %927 = vmatprep.subr.bf16.mxu0 0
      %928 = vmatpush1.bf16.msra.mxu0 0
      %929 = vmatprep.subr.bf16.mxu0 0
      %930 = vmatpush1.bf16.msra.mxu0 0
      %931 = vmatprep.subr.bf16.mxu0 0
      %932 = vmatpush1.bf16.msra.mxu0 0
      %933 = vmatprep.subr.bf16.mxu0 0
      %934 = vmatpush1.bf16.msra.mxu0 0
      %935 = vmatprep.subr.bf16.mxu0 0
      %936 = vmatpush1.bf16.msra.mxu0 0
      %937 = vmatprep.subr.bf16.mxu0 0
      %938 = vmatpush1.bf16.msra.mxu0 0
      %939 = vmatprep.subr.bf16.mxu0 0
      %940 = vmatpush1.bf16.msra.mxu0 0
      %941 = vmatprep.subr.bf16.mxu0 0
      %942 = vmatpush1.bf16.msra.mxu0 0
      %943 = vmatprep.subr.bf16.mxu0 0
      %944 = vmatpush1.bf16.msra.mxu0 0
      %945 = vmatprep.subr.bf16.mxu0 0
      %946 = vmatpush1.bf16.msra.mxu0 0
      %947 = vmatprep.subr.bf16.mxu0 0
      %948 = vmatpush1.bf16.msra.mxu0 0
      %949 = vmatprep.subr.bf16.mxu0 0
      %950 = vmatpush1.bf16.msra.mxu0 0
      %951 = vmatprep.subr.bf16.mxu0 0
      %952 = vmatpush1.bf16.msra.mxu0 0
      %953 = vmatprep.subr.bf16.mxu0 0
      %954 = vmatpush1.bf16.msra.mxu0 0
      %955 = vmatprep.subr.bf16.mxu0 0
      %956 = vmatpush1.bf16.msra.mxu0 0
      %957 = vmatprep.mubr.bf16.mxu0 0
      %958 = vmatmul.mubr.bf16.gmra.mrb[0].mxu0 %v920
      %v959 = vpop.f32.mrb[0].mxu0
      %v960 = vadd.f32 %v496, %v959
      %v961 = vpop.f32.mrb[0].mxu0
      %v962 = vpop.f32.mrb[0].mxu0
      %v963 = vpop.f32.mrb[0].mxu0
      %964 = vdwg.mxu0
      %v966 = vsel %vm351, %v169, 0
      %v969 = vsel %vm396, %v177, 0
      %971 = vmatprep.subr.bf16.mxu0 0
      %972 = vmatpush1.bf16.msra.mxu0 %v969
      %973 = vmatprep.subr.bf16.mxu0 0
      %974 = vmatpush1.bf16.msra.mxu0 0
      %975 = vmatprep.subr.bf16.mxu0 0
      %976 = vmatpush1.bf16.msra.mxu0 0
      %977 = vmatprep.subr.bf16.mxu0 0
      %978 = vmatpush1.bf16.msra.mxu0 0
      %979 = vmatprep.subr.bf16.mxu0 0
      %980 = vmatpush1.bf16.msra.mxu0 0
      %981 = vmatprep.subr.bf16.mxu0 0
      %982 = vmatpush1.bf16.msra.mxu0 0
      %983 = vmatprep.subr.bf16.mxu0 0
      %984 = vmatpush1.bf16.msra.mxu0 0
      %985 = vmatprep.subr.bf16.mxu0 0
      %986 = vmatpush1.bf16.msra.mxu0 0
      %987 = vmatprep.subr.bf16.mxu0 0
      %988 = vmatpush1.bf16.msra.mxu0 0
      %989 = vmatprep.subr.bf16.mxu0 0
      %990 = vmatpush1.bf16.msra.mxu0 0
      %991 = vmatprep.subr.bf16.mxu0 0
      %992 = vmatpush1.bf16.msra.mxu0 0
      %993 = vmatprep.subr.bf16.mxu0 0
      %994 = vmatpush1.bf16.msra.mxu0 0
      %995 = vmatprep.subr.bf16.mxu0 0
      %996 = vmatpush1.bf16.msra.mxu0 0
      %997 = vmatprep.subr.bf16.mxu0 0
      %998 = vmatpush1.bf16.msra.mxu0 0
      %999 = vmatprep.subr.bf16.mxu0 0
      %1000 = vmatpush1.bf16.msra.mxu0 0
      %1001 = vmatprep.subr.bf16.mxu0 0
      %1002 = vmatpush1.bf16.msra.mxu0 0
      %1003 = vmatprep.mubr.bf16.mxu0 0
      %1004 = vmatmul.mubr.bf16.gmra.mrb[0].mxu0 %v966
      %v1005 = vpop.f32.mrb[0].mxu0
      %v1006 = vadd.f32 %v558, %v1005
      %v1007 = vpop.f32.mrb[0].mxu0
      %v1008 = vpop.f32.mrb[0].mxu0
      %v1009 = vpop.f32.mrb[0].mxu0
      %1010 = vdwg.mxu0
      %v1012 = vsel %vm351, %v170, 0
      %v1015 = vsel %vm396, %v178, 0
      %1017 = vmatprep.subr.bf16.mxu0 0
      %1018 = vmatpush1.bf16.msra.mxu0 %v1015
      %1019 = vmatprep.subr.bf16.mxu0 0
      %1020 = vmatpush1.bf16.msra.mxu0 0
      %1021 = vmatprep.subr.bf16.mxu0 0
      %1022 = vmatpush1.bf16.msra.mxu0 0
      %1023 = vmatprep.subr.bf16.mxu0 0
      %1024 = vmatpush1.bf16.msra.mxu0 0
      %1025 = vmatprep.subr.bf16.mxu0 0
      %1026 = vmatpush1.bf16.msra.mxu0 0
      %1027 = vmatprep.subr.bf16.mxu0 0
      %1028 = vmatpush1.bf16.msra.mxu0 0
      %1029 = vmatprep.subr.bf16.mxu0 0
      %1030 = vmatpush1.bf16.msra.mxu0 0
      %1031 = vmatprep.subr.bf16.mxu0 0
      %1032 = vmatpush1.bf16.msra.mxu0 0
      %1033 = vmatprep.subr.bf16.mxu0 0
      %1034 = vmatpush1.bf16.msra.mxu0 0
      %1035 = vmatprep.subr.bf16.mxu0 0
      %1036 = vmatpush1.bf16.msra.mxu0 0
      %1037 = vmatprep.subr.bf16.mxu0 0
      %1038 = vmatpush1.bf16.msra.mxu0 0
      %1039 = vmatprep.subr.bf16.mxu0 0
      %1040 = vmatpush1.bf16.msra.mxu0 0
      %1041 = vmatprep.subr.bf16.mxu0 0
      %1042 = vmatpush1.bf16.msra.mxu0 0
      %1043 = vmatprep.subr.bf16.mxu0 0
      %1044 = vmatpush1.bf16.msra.mxu0 0
      %1045 = vmatprep.subr.bf16.mxu0 0
      %1046 = vmatpush1.bf16.msra.mxu0 0
      %1047 = vmatprep.subr.bf16.mxu0 0
      %1048 = vmatpush1.bf16.msra.mxu0 0
      %1049 = vmatprep.mubr.bf16.mxu0 0
      %1050 = vmatmul.mubr.bf16.gmra.mrb[0].mxu0 %v1012
      %v1051 = vpop.f32.mrb[0].mxu0
      %v1052 = vadd.f32 %v620, %v1051
      %v1053 = vpop.f32.mrb[0].mxu0
      %v1054 = vpop.f32.mrb[0].mxu0
      %v1055 = vpop.f32.mrb[0].mxu0
      %1056 = vdwg.mxu0
      %v1058 = vsel %vm351, %v171, 0
      %v1061 = vsel %vm396, %v179, 0
      %1063 = vmatprep.subr.bf16.mxu0 0
      %1064 = vmatpush1.bf16.msra.mxu0 %v1061
      %1065 = vmatprep.subr.bf16.mxu0 0
      %1066 = vmatpush1.bf16.msra.mxu0 0
      %1067 = vmatprep.subr.bf16.mxu0 0
      %1068 = vmatpush1.bf16.msra.mxu0 0
      %1069 = vmatprep.subr.bf16.mxu0 0
      %1070 = vmatpush1.bf16.msra.mxu0 0
      %1071 = vmatprep.subr.bf16.mxu0 0
      %1072 = vmatpush1.bf16.msra.mxu0 0
      %1073 = vmatprep.subr.bf16.mxu0 0
      %1074 = vmatpush1.bf16.msra.mxu0 0
      %1075 = vmatprep.subr.bf16.mxu0 0
      %1076 = vmatpush1.bf16.msra.mxu0 0
      %1077 = vmatprep.subr.bf16.mxu0 0
      %1078 = vmatpush1.bf16.msra.mxu0 0
      %1079 = vmatprep.subr.bf16.mxu0 0
      %1080 = vmatpush1.bf16.msra.mxu0 0
      %1081 = vmatprep.subr.bf16.mxu0 0
      %1082 = vmatpush1.bf16.msra.mxu0 0
      %1083 = vmatprep.subr.bf16.mxu0 0
      %1084 = vmatpush1.bf16.msra.mxu0 0
      %1085 = vmatprep.subr.bf16.mxu0 0
      %1086 = vmatpush1.bf16.msra.mxu0 0
      %1087 = vmatprep.subr.bf16.mxu0 0
      %1088 = vmatpush1.bf16.msra.mxu0 0
      %1089 = vmatprep.subr.bf16.mxu0 0
      %1090 = vmatpush1.bf16.msra.mxu0 0
      %1091 = vmatprep.subr.bf16.mxu0 0
      %1092 = vmatpush1.bf16.msra.mxu0 0
      %1093 = vmatprep.subr.bf16.mxu0 0
      %1094 = vmatpush1.bf16.msra.mxu0 0
      %1095 = vmatprep.mubr.bf16.mxu0 0
      %1096 = vmatmul.mubr.bf16.gmra.mrb[0].mxu0 %v1058
      %v1097 = vpop.f32.mrb[0].mxu0
      %v1098 = vadd.f32 %v682, %v1097
      %v1099 = vpop.f32.mrb[0].mxu0
      %v1100 = vpop.f32.mrb[0].mxu0
      %v1101 = vpop.f32.mrb[0].mxu0
      %1102 = vdwg.mxu0
      %v1104 = vsel %vm351, %v172, 0
      %v1107 = vsel %vm396, %v180, 0
      %1109 = vmatprep.subr.bf16.mxu0 0
      %1110 = vmatpush1.bf16.msra.mxu0 %v1107
      %1111 = vmatprep.subr.bf16.mxu0 0
      %1112 = vmatpush1.bf16.msra.mxu0 0
      %1113 = vmatprep.subr.bf16.mxu0 0
      %1114 = vmatpush1.bf16.msra.mxu0 0
      %1115 = vmatprep.subr.bf16.mxu0 0
      %1116 = vmatpush1.bf16.msra.mxu0 0
      %1117 = vmatprep.subr.bf16.mxu0 0
      %1118 = vmatpush1.bf16.msra.mxu0 0
      %1119 = vmatprep.subr.bf16.mxu0 0
      %1120 = vmatpush1.bf16.msra.mxu0 0
      %1121 = vmatprep.subr.bf16.mxu0 0
      %1122 = vmatpush1.bf16.msra.mxu0 0
      %1123 = vmatprep.subr.bf16.mxu0 0
      %1124 = vmatpush1.bf16.msra.mxu0 0
      %1125 = vmatprep.subr.bf16.mxu0 0
      %1126 = vmatpush1.bf16.msra.mxu0 0
      %1127 = vmatprep.subr.bf16.mxu0 0
      %1128 = vmatpush1.bf16.msra.mxu0 0
      %1129 = vmatprep.subr.bf16.mxu0 0
      %1130 = vmatpush1.bf16.msra.mxu0 0
      %1131 = vmatprep.subr.bf16.mxu0 0
      %1132 = vmatpush1.bf16.msra.mxu0 0
      %1133 = vmatprep.subr.bf16.mxu0 0
      %1134 = vmatpush1.bf16.msra.mxu0 0
      %1135 = vmatprep.subr.bf16.mxu0 0
      %1136 = vmatpush1.bf16.msra.mxu0 0
      %1137 = vmatprep.subr.bf16.mxu0 0
      %1138 = vmatpush1.bf16.msra.mxu0 0
      %1139 = vmatprep.subr.bf16.mxu0 0
      %1140 = vmatpush1.bf16.msra.mxu0 0
      %1141 = vmatprep.mubr.bf16.mxu0 0
      %1142 = vmatmul.mubr.bf16.gmra.mrb[0].mxu0 %v1104
      %v1143 = vpop.f32.mrb[0].mxu0
      %v1144 = vadd.f32 %v744, %v1143
      %v1145 = vpop.f32.mrb[0].mxu0
      %v1146 = vpop.f32.mrb[0].mxu0
      %v1147 = vpop.f32.mrb[0].mxu0
      %1148 = vdwg.mxu0
      %v1150 = vsel %vm351, %v173, 0
      %v1153 = vsel %vm396, %v181, 0
      %1155 = vmatprep.subr.bf16.mxu0 0
      %1156 = vmatpush1.bf16.msra.mxu0 %v1153
      %1157 = vmatprep.subr.bf16.mxu0 0
      %1158 = vmatpush1.bf16.msra.mxu0 0
      %1159 = vmatprep.subr.bf16.mxu0 0
      %1160 = vmatpush1.bf16.msra.mxu0 0
      %1161 = vmatprep.subr.bf16.mxu0 0
      %1162 = vmatpush1.bf16.msra.mxu0 0
      %1163 = vmatprep.subr.bf16.mxu0 0
      %1164 = vmatpush1.bf16.msra.mxu0 0
      %1165 = vmatprep.subr.bf16.mxu0 0
      %1166 = vmatpush1.bf16.msra.mxu0 0
      %1167 = vmatprep.subr.bf16.mxu0 0
      %1168 = vmatpush1.bf16.msra.mxu0 0
      %1169 = vmatprep.subr.bf16.mxu0 0
      %1170 = vmatpush1.bf16.msra.mxu0 0
      %1171 = vmatprep.subr.bf16.mxu0 0
      %1172 = vmatpush1.bf16.msra.mxu0 0
      %1173 = vmatprep.subr.bf16.mxu0 0
      %1174 = vmatpush1.bf16.msra.mxu0 0
      %1175 = vmatprep.subr.bf16.mxu0 0
      %1176 = vmatpush1.bf16.msra.mxu0 0
      %1177 = vmatprep.subr.bf16.mxu0 0
      %1178 = vmatpush1.bf16.msra.mxu0 0
      %1179 = vmatprep.subr.bf16.mxu0 0
      %1180 = vmatpush1.bf16.msra.mxu0 0
      %1181 = vmatprep.subr.bf16.mxu0 0
      %1182 = vmatpush1.bf16.msra.mxu0 0
      %1183 = vmatprep.subr.bf16.mxu0 0
      %1184 = vmatpush1.bf16.msra.mxu0 0
      %1185 = vmatprep.subr.bf16.mxu0 0
      %1186 = vmatpush1.bf16.msra.mxu0 0
      %1187 = vmatprep.mubr.bf16.mxu0 0
      %1188 = vmatmul.mubr.bf16.gmra.mrb[0].mxu0 %v1150
      %v1189 = vpop.f32.mrb[0].mxu0
      %v1190 = vadd.f32 %v806, %v1189
      %v1191 = vpop.f32.mrb[0].mxu0
      %v1192 = vpop.f32.mrb[0].mxu0
      %v1193 = vpop.f32.mrb[0].mxu0
      %1194 = vdwg.mxu0
      %v1196 = vsel %vm351, %v174, 0
      %v1199 = vsel %vm396, %v182, 0
      %1201 = vmatprep.subr.bf16.mxu0 0
      %1202 = vmatpush1.bf16.msra.mxu0 %v1199
      %1203 = vmatprep.subr.bf16.mxu0 0
      %1204 = vmatpush1.bf16.msra.mxu0 0
      %1205 = vmatprep.subr.bf16.mxu0 0
      %1206 = vmatpush1.bf16.msra.mxu0 0
      %1207 = vmatprep.subr.bf16.mxu0 0
      %1208 = vmatpush1.bf16.msra.mxu0 0
      %1209 = vmatprep.subr.bf16.mxu0 0
      %1210 = vmatpush1.bf16.msra.mxu0 0
      %1211 = vmatprep.subr.bf16.mxu0 0
      %1212 = vmatpush1.bf16.msra.mxu0 0
      %1213 = vmatprep.subr.bf16.mxu0 0
      %1214 = vmatpush1.bf16.msra.mxu0 0
      %1215 = vmatprep.subr.bf16.mxu0 0
      %1216 = vmatpush1.bf16.msra.mxu0 0
      %1217 = vmatprep.subr.bf16.mxu0 0
      %1218 = vmatpush1.bf16.msra.mxu0 0
      %1219 = vmatprep.subr.bf16.mxu0 0
      %1220 = vmatpush1.bf16.msra.mxu0 0
      %1221 = vmatprep.subr.bf16.mxu0 0
      %1222 = vmatpush1.bf16.msra.mxu0 0
      %1223 = vmatprep.subr.bf16.mxu0 0
      %1224 = vmatpush1.bf16.msra.mxu0 0
      %1225 = vmatprep.subr.bf16.mxu0 0
      %1226 = vmatpush1.bf16.msra.mxu0 0
      %1227 = vmatprep.subr.bf16.mxu0 0
      %1228 = vmatpush1.bf16.msra.mxu0 0
      %1229 = vmatprep.subr.bf16.mxu0 0
      %1230 = vmatpush1.bf16.msra.mxu0 0
      %1231 = vmatprep.subr.bf16.mxu0 0
      %1232 = vmatpush1.bf16.msra.mxu0 0
      %1233 = vmatprep.mubr.bf16.mxu0 0
      %1234 = vmatmul.mubr.bf16.gmra.mrb[0].mxu0 %v1196
      %v1235 = vpop.f32.mrb[0].mxu0
      %v1236 = vadd.f32 %v868, %v1235
      %v1237 = vpop.f32.mrb[0].mxu0
      %v1238 = vpop.f32.mrb[0].mxu0
      %v1239 = vpop.f32.mrb[0].mxu0
      %1240 = vdwg.mxu0
      %s1241 = smul.u32 0, 2
      %s1242 = scalar_lea.vmem %s164, %s1241
      %vm1243 = vcmask 58368
      %1244 = vst.msk [vmem:[%s1242] sm:$0x3] %vm1243, %v914
      %1245 = vst.msk [vmem:[%s1242 + $0x2] sm:$0x3] %vm1243, %v960
      %1246 = vst.msk [vmem:[%s1242 + $0x4] sm:$0x3] %vm1243, %v1006
      %1247 = vst.msk [vmem:[%s1242 + $0x6] sm:$0x3] %vm1243, %v1052
      %1248 = vst.msk [vmem:[%s1242 + $0x8] sm:$0x3] %vm1243, %v1098
      %1249 = vst.msk [vmem:[%s1242 + $0xa] sm:$0x3] %vm1243, %v1144
      %1250 = vst.msk [vmem:[%s1242 + $0xc] sm:$0x3] %vm1243, %v1190
      %1251 = vst.msk [vmem:[%s1242 + $0xe] sm:$0x3] %vm1243, %v1236
      %s1252 = smul.u32 8, %s13
      %p1253 = scmp.lt.s32.totalorder %s1252, 31
      %s1254 = scalar_select %p1253, %s1252, 31
      %s1255 = smul.addr %s1254, 2
      %s1256 = scalar_lea.vmem %s2, %s1255
      // Predicated region
      $region29: #{sub_conv2d_forward.1} parent=27 // pred_check
        %p1257 = pneg %p83
      $region30: #{sub_conv2d_forward.1} parent=27 // pred_check_branch
        %1259 = sbr.rel (%p1257) target = $region32
      $region31: #{sub_conv2d_forward.1} parent=27 // pred_region
        %s1260 = smul.u32 8, %s13
      $region32: #{sub_conv2d_forward.1} parent=27 // pred_fallthru
        _
    $region28: #{sub_conv2d_forward.1} parent=5 // pred_fallthru
      _
    %p1261 = scmp.le.s32.totalorder 2, %s8
    // Predicated region
    $region33: #{sub_conv2d_forward.1} parent=5 // pred_check
      %p1262 = pneg %p1261
    $region34: #{sub_conv2d_forward.1} parent=5 // pred_check_branch
      %1264 = sbr.rel (%p1262) target = $region36
    $region35: #{sub_conv2d_forward.1} parent=5 // pred_region
      %s1265 = ssub.s32 %s8, 2
      // Predicated region
      $region37: #{sub_conv2d_forward.1} parent=35 // pred_check
        %p1266 = pneg %p89
      $region38: #{sub_conv2d_forward.1} parent=35 // pred_check_branch
        %1268 = sbr.rel (%p1266) target = $region40
      $region39: #{sub_conv2d_forward.1} parent=35 // pred_region
        %s1269 = smul.u32 8, %s14
        %p1270 = scmp.lt.s32.totalorder %s1269, 31
        %s1271 = scalar_select %p1270, %s1269, 31
        %s1272 = smul.addr %s1271, 2
        %s1273 = scalar_lea.vmem %s2, %s1272
      $region40: #{sub_conv2d_forward.1} parent=35 // pred_fallthru
        _
    $region36: #{sub_conv2d_forward.1} parent=5 // pred_fallthru
      _
  $region6: #{sub_conv2d_forward.1} parent=0 // loop_footer
    %s12 = sadd.s32 1, %s8
  $region7: #{sub_conv2d_forward.1} parent=0 // loop_footer_branch
    %7 = sbr.rel target = $region3
  $region8: #{sub_conv2d_forward.1} parent=0 // loop_exit
    _

</llo_original>
